<compile_context>
chip_gen: v6e
topology: v6e:2x2x1
jax: 0.10.0
libtpu: 0.0.40
codegen_flags: <defaults>
</compile_context>

<pallas_src>
import jax
import jax.numpy as jnp
from jax.experimental import pallas as pl
from jax.experimental.pallas import tpu as pltpu

# ---- model hyper-parameters (small, consistent with the module) -------------
INPUT_SIZE = 8          # input_size (features)
LAYER_DIM = 16          # layer_dim  (trees per layer)
NUM_LAYERS = 2          # num_layers
TREE_DIM = 2            # tree_dim   (classes)
DEPTH = 4               # depth      (splits per tree)
RESP_DIM = TREE_DIM + 1            # ODST response channels inside DenseBlock
NUM_BINS = 2 ** DEPTH
BATCH = 8

TB = LAYER_DIM * NUM_BINS          # 256: trees*bins   (lane-dense per-depth width)
W = DEPTH * TB                     # 1024: replicated selector width
TK = LAYER_DIM * RESP_DIM          # 48:  flattened per-layer response width
TK_PAD = 128                       # lane-padded response width
OUT_PAD = 128                      # lane-padded output width


# --------------------------- plain-JAX helpers (glue) ------------------------
def entmax15(z, axis):
    """Exact 1.5-entmax (sort-based), matches the `entmax` package forward."""
    z = z / 2.0
    z = z - jnp.max(z, axis=axis, keepdims=True)
    z_srt = -jnp.sort(-z, axis=axis)                      # descending
    k = z.shape[axis]
    shape = [1] * z.ndim
    shape[axis] = k
    rho = jnp.arange(1, k + 1, dtype=z.dtype).reshape(shape)
    mean = jnp.cumsum(z_srt, axis=axis) / rho
    mean_sq = jnp.cumsum(z_srt ** 2, axis=axis) / rho
    ss = rho * (mean_sq - mean ** 2)
    delta = (1.0 - ss) / rho
    delta_nz = jnp.clip(delta, 0.0, None)
    tau = mean - jnp.sqrt(delta_nz)
    support = jnp.sum((tau <= z_srt).astype(jnp.int32), axis=axis, keepdims=True)
    tau_star = jnp.take_along_axis(tau, support - 1, axis=axis)
    return jnp.clip(z - tau_star, 0.0, None) ** 2


def sparsemax(z, axis=-1):
    """Generic sparsemax (used only by the pure-JAX reference)."""
    z_srt = -jnp.sort(-z, axis=axis)
    k = z.shape[axis]
    shape = [1] * z.ndim
    shape[axis] = k
    rho = jnp.arange(1, k + 1, dtype=z.dtype).reshape(shape)
    cssv = jnp.cumsum(z_srt, axis=axis) - 1.0
    cond = (rho * z_srt) > cssv
    supp = jnp.sum(cond.astype(jnp.int32), axis=axis, keepdims=True)
    tau = jnp.take_along_axis(cssv, supp - 1, axis=axis) / supp.astype(z.dtype)
    return jnp.clip(z - tau, 0.0, None)


def make_bin_codes():
    idx = jnp.arange(NUM_BINS)
    off = 2 ** jnp.arange(DEPTH)
    return ((idx[None, :] // off[:, None]) % 2).astype(jnp.float32)   # [DEPTH, NUM_BINS]


# ------------------------------- Pallas kernel -------------------------------
def _tree_kernel(x_ref, fs0_ref, fs1h_ref, place_ref, resp_ref, lam_ref, dc_ref,
                 out_ref):
    """Lane-dense two-layer ODST DenseBlock + folded Lambda mean.

    x_ref     : [Bt, INPUT_SIZE]
    fs0_ref   : [INPUT_SIZE, W]    layer-0 selectors (bin-replicated)
    fs1h_ref  : [TK_PAD, W]        layer-1 selectors; rows 0:TK act on h0_flat,
                                   rows TK:TK+F0 act on the x packed into h0's
                                   dead lanes, rest zero
    place_ref : [INPUT_SIZE, TK_PAD]  one-hot placement of x into cols TK:TK+F0
    resp_ref  : [2, TB, TK_PAD]    block-diagonal response matrices per layer
    lam_ref   : [TK_PAD, OUT_PAD]  folded Lambda (mean over trees, first TREE_DIM)
    dc_ref    : [8, W]             rows 0/1: layer-0 match scale/bias (codes
                                   folded in), rows 2/3: layer-1; rest unused
    out_ref   : [Bt, OUT_PAD]      lane-dense padded output
    """
    x = x_ref[...]                                             # [Bt, F0]

    # Per-depth constants, each used exactly once per layer (single implicit
    # [1,W]->[Bt,W] sublane broadcast per constant — nothing to hoist/CSE).
    sc0, bi0 = dc_ref[0:1, :], dc_ref[1:2, :]
    sc1, bi1 = dc_ref[2:3, :], dc_ref[3:4, :]

    def bins_weight(fv, sc, bi):
        # Codes folded into sc/bi in glue: match == b1 + codes*(1 - 2*b1)
        # == clip(fv*sc + bi, 0, 1).  One fused mul-add-clip over [Bt, W].
        match = jnp.clip(fv * sc + bi, 0.0, 1.0)               # [Bt, W]
        rw = match[:, 0:TB]
        for d in range(1, DEPTH):                              # DEPTH is tiny: unroll
            rw = rw * match[:, d * TB:(d + 1) * TB]            # [Bt, TB]
        return rw

    # ---- ODST layer 0 --------------------------------------------------------
    fv0 = jnp.dot(x, fs0_ref[...], preferred_element_type=jnp.float32)   # [Bt, W]
    rw0 = bins_weight(fv0, sc0, bi0)                                     # [Bt, TB]
    h0 = jnp.dot(rw0, resp_ref[0], preferred_element_type=jnp.float32)   # [Bt, TK_PAD]
    # Pack x into h0's dead padded lanes (cols TK:TK+F0).  The fs1h matmul
    # below then computes the full dense-connection feature values in one
    # K=128 contraction; the Lambda matmul is unaffected (its rows TK:TK+F0
    # are zero).
    h0 = h0 + jnp.dot(x, place_ref[...], preferred_element_type=jnp.float32)

    # ---- ODST layer 1 (dense connection: concat([x, h0_flat]) in one matmul) -
    fv1 = jnp.dot(h0, fs1h_ref[...], preferred_element_type=jnp.float32)  # [Bt, W]
    rw1 = bins_weight(fv1, sc1, bi1)
    h1 = jnp.dot(rw1, resp_ref[1], preferred_element_type=jnp.float32)    # [Bt, TK_PAD]

    # ---- Lambda: mean over (layer, tree) of first TREE_DIM channels, folded
    #      into one matmul producing a lane-dense padded output slab.
    out_ref[...] = jnp.dot(h0 + h1, lam_ref[...],
                           preferred_element_type=jnp.float32)


def _round_up(n, m):
    return ((n + m - 1) // m) * m


@jax.jit
def clf_differential_tree_forward(x, kernel_params):
    fs0, fs1h, place, resp_bd, lam, dc = kernel_params
    b = x.shape[0]

    # Balanced batch tiles: cap ~512 rows/tile (VMEM-safe on v5e/v6e/v7x),
    # padding waste bounded to <8 rows per tile, and >=2 programs for large
    # batches so dimension_semantics=("parallel",) can use both v7x TCs.
    max_tile = 512
    n_tiles = max(-(-b // max_tile), 2 if b >= 256 else 1)
    b_tile = _round_up(-(-b // n_tiles), 8)
    b_pad = n_tiles * b_tile
    xp = jnp.pad(x, ((0, b_pad - b), (0, 0))) if b_pad != b else x

    out_padded = pl.pallas_call(
        _tree_kernel,
        out_shape=jax.ShapeDtypeStruct((b_pad, OUT_PAD), jnp.float32),
        grid=(n_tiles,),
        in_specs=[
            pl.BlockSpec((b_tile, INPUT_SIZE), lambda i: (i, 0)),
            # parameters: full-array blocks, constant index_map -> VMEM-resident
            pl.BlockSpec(fs0.shape, lambda i: (0, 0)),
            pl.BlockSpec(fs1h.shape, lambda i: (0, 0)),
            pl.BlockSpec(place.shape, lambda i: (0, 0)),
            pl.BlockSpec(resp_bd.shape, lambda i: (0, 0, 0)),
            pl.BlockSpec(lam.shape, lambda i: (0, 0)),
            pl.BlockSpec(dc.shape, lambda i: (0, 0)),
        ],
        out_specs=pl.BlockSpec((b_tile, OUT_PAD), lambda i: (i, 0)),
        compiler_params=pltpu.CompilerParams(
            dimension_semantics=("parallel",)),
    )(xp, fs0, fs1h, place, resp_bd, lam, dc)
    return out_padded[:b, :TREE_DIM]


# --------------------------- parameters & packing ----------------------------
def init_params(key):
    """Deterministic synthetic init matching the PyTorch parameter shapes."""
    keys = jax.random.split(key, 6)
    f0 = INPUT_SIZE
    f1 = INPUT_SIZE + LAYER_DIM * RESP_DIM
    return dict(
        resp0=jax.random.normal(keys[0], (LAYER_DIM, RESP_DIM, NUM_BINS), jnp.float32),
        sel0=jax.random.uniform(keys[1], (f0, LAYER_DIM, DEPTH), jnp.float32),
        thr0=0.5 * jax.random.normal(keys[2], (LAYER_DIM, DEPTH), jnp.float32),
        logt0=jnp.zeros((LAYER_DIM, DEPTH), jnp.float32),
        resp1=jax.random.normal(keys[3], (LAYER_DIM, RESP_DIM, NUM_BINS), jnp.float32),
        sel1=jax.random.uniform(keys[4], (f1, LAYER_DIM, DEPTH), jnp.float32),
        thr1=0.5 * jax.random.normal(keys[5], (LAYER_DIM, DEPTH), jnp.float32),
        logt1=jnp.zeros((LAYER_DIM, DEPTH), jnp.float32),
    )


def pack_kernel_params(p):
    """Glue: entmax15 selectors + lane-dense / MXU-friendly re-arrangement.

    Column layout of the W-wide slabs: d*TB + t*NUM_BINS + c  (depth-major,
    tree, bin).  Flattened responses use column t*RESP_DIM + k (tree-major,
    channel-minor), matching the torch flatten/concat order.  Bin codes,
    exp(-log_temp) and thresholds are all folded into per-column match
    scale/bias rows so the kernel needs a single clip per depth column.
    """
    codes = make_bin_codes()                                       # [DEPTH, NUM_BINS]

    def selectors_rep(sel_logits):
        sel = entmax15(sel_logits, axis=0)                         # [F, T, D]
        rep = jnp.transpose(sel, (0, 2, 1))[..., None]             # [F, D, T, 1]
        rep = jnp.broadcast_to(rep, (sel.shape[0], DEPTH, LAYER_DIM, NUM_BINS))
        return rep.reshape(sel.shape[0], W)

    fs0_rep = selectors_rep(p["sel0"])                             # [F0, W]
    fs1_rep = selectors_rep(p["sel1"])                             # [F0+TK, W]

    # Layer-1 selectors acting on h0_flat (rows 0:TK) and on x packed into
    # h0's dead lanes (rows TK:TK+F0); remaining rows are zero padding.
    fs1h = jnp.zeros((TK_PAD, W), jnp.float32)
    fs1h = fs1h.at[0:TK].set(fs1_rep[INPUT_SIZE:])
    fs1h = fs1h.at[TK:TK + INPUT_SIZE].set(fs1_rep[:INPUT_SIZE])

    # One-hot placement of x into cols TK:TK+F0 of the layer-0 response slab.
    place = jnp.zeros((INPUT_SIZE, TK_PAD), jnp.float32)
    for j in range(INPUT_SIZE):
        place = place.at[j, TK + j].set(1.0)

    def rep_td(v):                                                 # [T, D] -> [W]
        r = jnp.transpose(v, (1, 0))[..., None]                    # [D, T, 1]
        r = jnp.broadcast_to(r, (DEPTH, LAYER_DIM, NUM_BINS))
        return r.reshape(W)

    codes_rep = jnp.broadcast_to(codes[:, None, :],
                                 (DEPTH, LAYER_DIM, NUM_BINS)).reshape(W)
    sign = 1.0 - 2.0 * codes_rep                                   # [W]

    def depth_consts(thr, logt):
        # b1 = clip(fv*scale + bias, 0, 1); match = codes + (1-2*codes)*b1
        #    = clip(fv*sc' + bi', 0, 1) with sc' = sign*scale, bi' = sign*bias + codes
        scale = jnp.exp(-logt)                                     # exp folded in glue
        bias = 0.5 - thr * scale
        return sign * rep_td(scale), sign * rep_td(bias) + codes_rep

    sc0, bi0 = depth_consts(p["thr0"], p["logt0"])
    sc1, bi1 = depth_consts(p["thr1"], p["logt1"])
    dc = jnp.zeros((8, W), jnp.float32)
    dc = dc.at[0].set(sc0).at[1].set(bi0).at[2].set(sc1).at[3].set(bi1)

    def resp_blkdiag(resp):                                        # [T, K, BINS] -> [TB, TK_PAD]
        bd = jnp.zeros((TB, TK_PAD), jnp.float32)
        for t in range(LAYER_DIM):
            bd = bd.at[t * NUM_BINS:(t + 1) * NUM_BINS,
                       t * RESP_DIM:(t + 1) * RESP_DIM].set(resp[t].T)
        return bd

    resp_bd = jnp.stack([resp_blkdiag(p["resp0"]), resp_blkdiag(p["resp1"])], axis=0)

    # Lambda: mean over NUM_LAYERS*LAYER_DIM trees of the first TREE_DIM channels.
    # Rows TK:TK+F0 stay zero, so the x packed into h0's lanes does not leak.
    lam = jnp.zeros((TK_PAD, OUT_PAD), jnp.float32)
    inv = 1.0 / (NUM_LAYERS * LAYER_DIM)
    for t in range(LAYER_DIM):
        for j in range(TREE_DIM):
            lam = lam.at[t * RESP_DIM + j, j].set(inv)

    return (fs0_rep, fs1h, place, resp_bd, lam, dc)


# ----------------------------- pure-JAX reference ----------------------------
def reference_forward(x, p):
    codes = make_bin_codes()
    codes_1hot = jnp.stack([codes, 1.0 - codes], axis=-1)          # [D, C, 2]

    def odst(inp, sel_logits, thr, logt, resp):
        sel = entmax15(sel_logits, axis=0)                         # [F, T, D]
        fv = jnp.einsum("bi,itd->btd", inp, sel)
        tl = (fv - thr[None]) * jnp.exp(-logt)[None]
        tl2 = jnp.stack([-tl, tl], axis=-1)                        # [B, T, D, 2]
        bins = sparsemax(tl2, axis=-1)
        bm = jnp.einsum("btds,dcs->btdc", bins, codes_1hot)
        rw = jnp.prod(bm, axis=-2)                                 # [B, T, C]
        return jnp.einsum("btc,tkc->btk", rw, resp)                # [B, T, K]

    h0 = odst(x, p["sel0"], p["thr0"], p["logt0"], p["resp0"])
    feats = jnp.concatenate([x, h0.reshape(x.shape[0], -1)], axis=-1)
    h1 = odst(feats, p["sel1"], p["thr1"], p["logt1"], p["resp1"])
    all_h = jnp.concatenate([h0, h1], axis=1)                      # [B, L*T, K]
    return all_h[..., :TREE_DIM].mean(axis=-2)


# ------------------------------------ main ------------------------------------
if __name__ == "__main__":
    key = jax.random.PRNGKey(0)
    kx, kp = jax.random.split(key)
    x = jax.random.normal(kx, (BATCH, INPUT_SIZE), jnp.float32)
    params = init_params(kp)
    kernel_params = pack_kernel_params(params)

    out = clf_differential_tree_forward(x, kernel_params)
    out = jax.block_until_ready(out)

    ref = reference_forward(x, params)
    assert out.shape == (BATCH, TREE_DIM), out.shape
    assert jnp.allclose(out, ref, atol=2e-3, rtol=2e-3), (out, ref)
    print("KERNEL_OK")
</pallas_src>

<mosaic_0001>
module attributes {stable_mosaic.version = 11 : i64} {
  func.func @_tree_kernel(%arg0: i32, %arg1: memref<8x8xf32, #tpu.memory_space<vmem>>, %arg2: memref<8x1024xf32, #tpu.memory_space<vmem>>, %arg3: memref<128x1024xf32, #tpu.memory_space<vmem>>, %arg4: memref<8x128xf32, #tpu.memory_space<vmem>>, %arg5: memref<2x256x128xf32, #tpu.memory_space<vmem>>, %arg6: memref<128x128xf32, #tpu.memory_space<vmem>>, %arg7: memref<8x1024xf32, #tpu.memory_space<vmem>>, %arg8: memref<8x128xf32, #tpu.memory_space<vmem>>) attributes {dimension_semantics = [#tpu.dimension_semantics<parallel>], iteration_bounds = array<i64: 1>, scalar_prefetch = 0 : i64, scratch_operands = 0 : i64, tpu.core_type = #tpu.core_type<tc>, window_params = [{transform_indices = @transform_0, window_bounds = array<i64: 8, 8>}, {pipeline_mode = #tpu.pipeline_mode<synchronous>, transform_indices = @transform_1, window_bounds = array<i64: 8, 1024>}, {pipeline_mode = #tpu.pipeline_mode<synchronous>, transform_indices = @transform_2, window_bounds = array<i64: 128, 1024>}, {pipeline_mode = #tpu.pipeline_mode<synchronous>, transform_indices = @transform_3, window_bounds = array<i64: 8, 128>}, {pipeline_mode = #tpu.pipeline_mode<synchronous>, transform_indices = @transform_4, window_bounds = array<i64: 2, 256, 128>}, {pipeline_mode = #tpu.pipeline_mode<synchronous>, transform_indices = @transform_5, window_bounds = array<i64: 128, 128>}, {pipeline_mode = #tpu.pipeline_mode<synchronous>, transform_indices = @transform_6, window_bounds = array<i64: 8, 1024>}, {transform_indices = @transform_7, window_bounds = array<i64: 8, 128>}]} {
    %c0 = arith.constant 0 : index
    %c0_0 = arith.constant 0 : index
    %0 = vector.load %arg1[%c0, %c0_0] : memref<8x8xf32, #tpu.memory_space<vmem>>, vector<8x8xf32>
    %c0_1 = arith.constant 0 : index
    %c0_2 = arith.constant 0 : index
    %1 = vector.load %arg7[%c0_1, %c0_2] : memref<8x1024xf32, #tpu.memory_space<vmem>>, vector<1x1024xf32>
    %c1 = arith.constant 1 : index
    %c0_3 = arith.constant 0 : index
    %2 = vector.load %arg7[%c1, %c0_3] : memref<8x1024xf32, #tpu.memory_space<vmem>>, vector<1x1024xf32>
    %c2 = arith.constant 2 : index
    %c0_4 = arith.constant 0 : index
    %3 = vector.load %arg7[%c2, %c0_4] : memref<8x1024xf32, #tpu.memory_space<vmem>>, vector<1x1024xf32>
    %c3 = arith.constant 3 : index
    %c0_5 = arith.constant 0 : index
    %4 = vector.load %arg7[%c3, %c0_5] : memref<8x1024xf32, #tpu.memory_space<vmem>>, vector<1x1024xf32>
    %c0_6 = arith.constant 0 : index
    %c0_7 = arith.constant 0 : index
    %5 = vector.load %arg2[%c0_6, %c0_7] : memref<8x1024xf32, #tpu.memory_space<vmem>>, vector<8x1024xf32>
    %cst = arith.constant dense<0.000000e+00> : vector<8x1024xf32>
    %6 = tpu.matmul %0, %5, %cst {dimension_numbers = #tpu.dot_dimension_numbers<[1], [0], [0], [1], [0, 0, 1, 1], [], []>} : vector<8x8xf32>, vector<8x1024xf32>, vector<8x1024xf32> -> vector<8x1024xf32>
    %7 = vector.broadcast %1 : vector<1x1024xf32> to vector<8x1024xf32>
    %8 = arith.mulf %6, %7 : vector<8x1024xf32>
    %9 = vector.broadcast %2 : vector<1x1024xf32> to vector<8x1024xf32>
    %10 = arith.addf %8, %9 : vector<8x1024xf32>
    %cst_8 = arith.constant 0.000000e+00 : f32
    %cst_9 = arith.constant 1.000000e+00 : f32
    %11 = vector.broadcast %cst_8 : f32 to vector<8x1024xf32>
    %12 = arith.maximumf %11, %10 : vector<8x1024xf32>
    %13 = vector.broadcast %cst_9 : f32 to vector<8x1024xf32>
    %14 = arith.minimumf %13, %12 : vector<8x1024xf32>
    %15 = vector.extract_strided_slice %14 {offsets = [0, 0], sizes = [8, 256], strides = [1, 1]} : vector<8x1024xf32> to vector<8x256xf32>
    %16 = vector.extract_strided_slice %14 {offsets = [0, 256], sizes = [8, 256], strides = [1, 1]} : vector<8x1024xf32> to vector<8x256xf32>
    %17 = arith.mulf %15, %16 : vector<8x256xf32>
    %18 = vector.extract_strided_slice %14 {offsets = [0, 512], sizes = [8, 256], strides = [1, 1]} : vector<8x1024xf32> to vector<8x256xf32>
    %19 = arith.mulf %17, %18 : vector<8x256xf32>
    %20 = vector.extract_strided_slice %14 {offsets = [0, 768], sizes = [8, 256], strides = [1, 1]} : vector<8x1024xf32> to vector<8x256xf32>
    %21 = arith.mulf %19, %20 : vector<8x256xf32>
    %c0_10 = arith.constant 0 : index
    %c0_11 = arith.constant 0 : index
    %c0_12 = arith.constant 0 : index
    %22 = vector.load %arg5[%c0_10, %c0_11, %c0_12] : memref<2x256x128xf32, #tpu.memory_space<vmem>>, vector<1x256x128xf32>
    %23 = vector.shape_cast %22 : vector<1x256x128xf32> to vector<256x128xf32>
    %cst_13 = arith.constant dense<0.000000e+00> : vector<8x128xf32>
    %24 = tpu.matmul %21, %23, %cst_13 {dimension_numbers = #tpu.dot_dimension_numbers<[1], [0], [0], [1], [0, 0, 1, 1], [], []>} : vector<8x256xf32>, vector<256x128xf32>, vector<8x128xf32> -> vector<8x128xf32>
    %c0_14 = arith.constant 0 : index
    %c0_15 = arith.constant 0 : index
    %25 = vector.load %arg4[%c0_14, %c0_15] : memref<8x128xf32, #tpu.memory_space<vmem>>, vector<8x128xf32>
    %cst_16 = arith.constant dense<0.000000e+00> : vector<8x128xf32>
    %26 = tpu.matmul %0, %25, %cst_16 {dimension_numbers = #tpu.dot_dimension_numbers<[1], [0], [0], [1], [0, 0, 1, 1], [], []>} : vector<8x8xf32>, vector<8x128xf32>, vector<8x128xf32> -> vector<8x128xf32>
    %27 = arith.addf %24, %26 : vector<8x128xf32>
    %c0_17 = arith.constant 0 : index
    %c0_18 = arith.constant 0 : index
    %28 = vector.load %arg3[%c0_17, %c0_18] : memref<128x1024xf32, #tpu.memory_space<vmem>>, vector<128x1024xf32>
    %cst_19 = arith.constant dense<0.000000e+00> : vector<8x1024xf32>
    %29 = tpu.matmul %27, %28, %cst_19 {dimension_numbers = #tpu.dot_dimension_numbers<[1], [0], [0], [1], [0, 0, 1, 1], [], []>} : vector<8x128xf32>, vector<128x1024xf32>, vector<8x1024xf32> -> vector<8x1024xf32>
    %30 = vector.broadcast %3 : vector<1x1024xf32> to vector<8x1024xf32>
    %31 = arith.mulf %29, %30 : vector<8x1024xf32>
    %32 = vector.broadcast %4 : vector<1x1024xf32> to vector<8x1024xf32>
    %33 = arith.addf %31, %32 : vector<8x1024xf32>
    %cst_20 = arith.constant 0.000000e+00 : f32
    %cst_21 = arith.constant 1.000000e+00 : f32
    %34 = vector.broadcast %cst_20 : f32 to vector<8x1024xf32>
    %35 = arith.maximumf %34, %33 : vector<8x1024xf32>
    %36 = vector.broadcast %cst_21 : f32 to vector<8x1024xf32>
    %37 = arith.minimumf %36, %35 : vector<8x1024xf32>
    %38 = vector.extract_strided_slice %37 {offsets = [0, 0], sizes = [8, 256], strides = [1, 1]} : vector<8x1024xf32> to vector<8x256xf32>
    %39 = vector.extract_strided_slice %37 {offsets = [0, 256], sizes = [8, 256], strides = [1, 1]} : vector<8x1024xf32> to vector<8x256xf32>
    %40 = arith.mulf %38, %39 : vector<8x256xf32>
    %41 = vector.extract_strided_slice %37 {offsets = [0, 512], sizes = [8, 256], strides = [1, 1]} : vector<8x1024xf32> to vector<8x256xf32>
    %42 = arith.mulf %40, %41 : vector<8x256xf32>
    %43 = vector.extract_strided_slice %37 {offsets = [0, 768], sizes = [8, 256], strides = [1, 1]} : vector<8x1024xf32> to vector<8x256xf32>
    %44 = arith.mulf %42, %43 : vector<8x256xf32>
    %c1_22 = arith.constant 1 : index
    %c0_23 = arith.constant 0 : index
    %c0_24 = arith.constant 0 : index
    %45 = vector.load %arg5[%c1_22, %c0_23, %c0_24] : memref<2x256x128xf32, #tpu.memory_space<vmem>>, vector<1x256x128xf32>
    %46 = vector.shape_cast %45 : vector<1x256x128xf32> to vector<256x128xf32>
    %cst_25 = arith.constant dense<0.000000e+00> : vector<8x128xf32>
    %47 = tpu.matmul %44, %46, %cst_25 {dimension_numbers = #tpu.dot_dimension_numbers<[1], [0], [0], [1], [0, 0, 1, 1], [], []>} : vector<8x256xf32>, vector<256x128xf32>, vector<8x128xf32> -> vector<8x128xf32>
    %48 = arith.addf %27, %47 : vector<8x128xf32>
    %c0_26 = arith.constant 0 : index
    %c0_27 = arith.constant 0 : index
    %49 = vector.load %arg6[%c0_26, %c0_27] : memref<128x128xf32, #tpu.memory_space<vmem>>, vector<128x128xf32>
    %cst_28 = arith.constant dense<0.000000e+00> : vector<8x128xf32>
    %50 = tpu.matmul %48, %49, %cst_28 {dimension_numbers = #tpu.dot_dimension_numbers<[1], [0], [0], [1], [0, 0, 1, 1], [], []>} : vector<8x128xf32>, vector<128x128xf32>, vector<8x128xf32> -> vector<8x128xf32>
    %c0_29 = arith.constant 0 : index
    %c0_30 = arith.constant 0 : index
    %51 = vector.load %arg8[%c0_29, %c0_30] : memref<8x128xf32, #tpu.memory_space<vmem>>, vector<8x128xf32>
    tpu.vector_store %arg8[%c0_29, %c0_30], %50 {strides = array<i32>} : memref<8x128xf32, #tpu.memory_space<vmem>>, vector<8x128xf32>,
    return
  }
  func.func @transform_0(%arg0: i32) -> (i32, i32) {
    %c0_i32 = arith.constant 0 : i32
    %c0_i32_0 = arith.constant 0 : i32
    return %arg0, %c0_i32 : i32, i32
  }
  func.func @transform_1(%arg0: i32) -> (i32, i32) {
    %c0_i32 = arith.constant 0 : i32
    %c0_i32_0 = arith.constant 0 : i32
    %c0_i32_1 = arith.constant 0 : i32
    return %c0_i32, %c0_i32_0 : i32, i32
  }
  func.func @transform_2(%arg0: i32) -> (i32, i32) {
    %c0_i32 = arith.constant 0 : i32
    %c0_i32_0 = arith.constant 0 : i32
    %c0_i32_1 = arith.constant 0 : i32
    return %c0_i32, %c0_i32_0 : i32, i32
  }
  func.func @transform_3(%arg0: i32) -> (i32, i32) {
    %c0_i32 = arith.constant 0 : i32
    %c0_i32_0 = arith.constant 0 : i32
    %c0_i32_1 = arith.constant 0 : i32
    return %c0_i32, %c0_i32_0 : i32, i32
  }
  func.func @transform_4(%arg0: i32) -> (i32, i32, i32) {
    %c0_i32 = arith.constant 0 : i32
    %c0_i32_0 = arith.constant 0 : i32
    %c0_i32_1 = arith.constant 0 : i32
    %c0_i32_2 = arith.constant 0 : i32
    return %c0_i32, %c0_i32_0, %c0_i32_1 : i32, i32, i32
  }
  func.func @transform_5(%arg0: i32) -> (i32, i32) {
    %c0_i32 = arith.constant 0 : i32
    %c0_i32_0 = arith.constant 0 : i32
    %c0_i32_1 = arith.constant 0 : i32
    return %c0_i32, %c0_i32_0 : i32, i32
  }
  func.func @transform_6(%arg0: i32) -> (i32, i32) {
    %c0_i32 = arith.constant 0 : i32
    %c0_i32_0 = arith.constant 0 : i32
    %c0_i32_1 = arith.constant 0 : i32
    return %c0_i32, %c0_i32_0 : i32, i32
  }
  func.func @transform_7(%arg0: i32) -> (i32, i32) {
    %c0_i32 = arith.constant 0 : i32
    %c0_i32_0 = arith.constant 0 : i32
    return %arg0, %c0_i32 : i32, i32
  }
}

</mosaic_0001>

<llo_original>
// kernel: clf_differential_tree_forward.1
$region0: #{clf_differential_tree_forward.1}
  #allocation0 [shape = 'u32[]', space=smem, size = 0x4, offset = 0x4, fixed_abs, tag = 'smem constant byte address 0x4 - core index']
  #allocation1 [shape = 'u32[144,128]{1,0:T(1,128)}', space=vmem, size = 0x12000, scoped, tag = 'internal scratch']
  %s0 = inlined_call_operand.hbm [shape: f32[8,8], index: 0, kind: input, shape index: {}]
  %s1 = inlined_call_operand.hbm [shape: f32[8,1024], index: 1, kind: input, shape index: {}]
  %s2 = inlined_call_operand.hbm [shape: f32[128,1024], index: 2, kind: input, shape index: {}]
  %s3 = inlined_call_operand.hbm [shape: f32[8,128], index: 3, kind: input, shape index: {}]
  %s4 = inlined_call_operand.hbm [shape: f32[2,256,128], index: 4, kind: input, shape index: {}]
  %s5 = inlined_call_operand.hbm [shape: f32[128,128], index: 5, kind: input, shape index: {}]
  %s6 = inlined_call_operand.hbm [shape: f32[8,1024], index: 6, kind: input, shape index: {}]
  %s7 = inlined_call_operand.vmem [shape: f32[8,128], index: 7, kind: output, shape index: {}]
  %s8 = sld [smem:[#allocation0]]
  $region66: #{clf_differential_tree_forward.1} parent=0
    _
  %s10 = ssub.s32 1, %s8
  %s11 = scalar_select 0, %s10, %s8
  $region1: #{clf_differential_tree_forward.1} parent=0
    #allocation2 [shape = 'u8[4096]{0}', space=vmem, size = 0x1000, scoped, tag = 'input window, operand 0, single buffered']
    #allocation3 [shape = 's32[1]{0}', space=sflag, size = 0x4, scoped, tag = 'scoped memory for clf_differential_tree_forward.1']
    #allocation4 [shape = 'u8[32768]{0}', space=vmem, size = 0x8000, scoped, tag = 'input window, operand 1, single buffered']
    #allocation5 [shape = 's32[1]{0}', space=sflag, size = 0x4, scoped, tag = 'scoped memory for clf_differential_tree_forward.1']
    #allocation6 [shape = 'u8[524288]{0}', space=vmem, size = 0x80000, scoped, tag = 'input window, operand 2, single buffered']
    #allocation7 [shape = 'u8[4096]{0}', space=vmem, size = 0x1000, scoped, tag = 'input window, operand 3, single buffered']
    #allocation8 [shape = 's32[1]{0}', space=sflag, size = 0x4, scoped, tag = 'scoped memory for clf_differential_tree_forward.1']
    #allocation9 [shape = 'u8[262144]{0}', space=vmem, size = 0x40000, scoped, tag = 'input window, operand 4, single buffered']
    #allocation10 [shape = 'u8[65536]{0}', space=vmem, size = 0x10000, scoped, tag = 'input window, operand 5, single buffered']
    #allocation11 [shape = 's32[1]{0}', space=sflag, size = 0x4, scoped, tag = 'scoped memory for clf_differential_tree_forward.1']
    #allocation12 [shape = 'u8[32768]{0}', space=vmem, size = 0x8000, scoped, tag = 'input window, operand 6, single buffered']
    %12 = vsyncpa [#allocation3], 0
    %13 = vsyncpa [#allocation5], 0
    %14 = vsyncpa [#allocation8], 0
    %15 = vsyncpa [#allocation11], 0
    // Predicated region
    $region2: #{clf_differential_tree_forward.1} parent=1 // pred_check
      _
    $region3: #{clf_differential_tree_forward.1} parent=1 // pred_check_branch
      %17 = sbr.rel (0) target = $region5
    $region4: #{clf_differential_tree_forward.1} parent=1 // pred_region
      %s19 = ssub.s32 128, 128
      %20 = vsyncadd [#allocation3], %s19
      %s22 = sshll.u32 [#allocation2], 4
      %s23 = int_to_ptr.vmem [resolvable:$true] %s22
      %25 = dma.hbm_to_vmem [thread:$0]  %s0, 128, %s23, [#allocation3]
    $region5: #{clf_differential_tree_forward.1} parent=1 // pred_fallthru
      _
    // Predicated region
    $region6: #{clf_differential_tree_forward.1} parent=1 // pred_check
      _
    $region7: #{clf_differential_tree_forward.1} parent=1 // pred_check_branch
      %27 = sbr.rel (0) target = $region9
    $region8: #{clf_differential_tree_forward.1} parent=1 // pred_region
      %s29 = ssub.s32 1024, 1024
      %30 = vsyncadd [#allocation5], %s29
      %s32 = sshll.u32 [#allocation4], 4
      %s33 = int_to_ptr.vmem [resolvable:$true] %s32
      %35 = dma.hbm_to_vmem [thread:$0]  %s1, 1024, %s33, [#allocation5]
    $region9: #{clf_differential_tree_forward.1} parent=1 // pred_fallthru
      _
    // Predicated region
    $region10: #{clf_differential_tree_forward.1} parent=1 // pred_check
      _
    $region11: #{clf_differential_tree_forward.1} parent=1 // pred_check_branch
      %37 = sbr.rel (0) target = $region13
    $region12: #{clf_differential_tree_forward.1} parent=1 // pred_region
      %s39 = ssub.s32 16384, 16384
      %40 = vsyncadd [#allocation5], %s39
      %s41 = sshll.u32 [#allocation6], 4
      %s42 = int_to_ptr.vmem [resolvable:$true] %s41
      %47 = dma.hbm_to_vmem [thread:$0]  %s2, 16384, %s42, [#allocation5], 1024, 1024, 64
    $region13: #{clf_differential_tree_forward.1} parent=1 // pred_fallthru
      _
    // Predicated region
    $region14: #{clf_differential_tree_forward.1} parent=1 // pred_check
      _
    $region15: #{clf_differential_tree_forward.1} parent=1 // pred_check_branch
      %49 = sbr.rel (0) target = $region17
    $region16: #{clf_differential_tree_forward.1} parent=1 // pred_region
      %s51 = ssub.s32 128, 128
      %52 = vsyncadd [#allocation8], %s51
      %s54 = sshll.u32 [#allocation7], 4
      %s55 = int_to_ptr.vmem [resolvable:$true] %s54
      %57 = dma.hbm_to_vmem [thread:$0]  %s3, 128, %s55, [#allocation8]
    $region17: #{clf_differential_tree_forward.1} parent=1 // pred_fallthru
      _
    // Predicated region
    $region18: #{clf_differential_tree_forward.1} parent=1 // pred_check
      _
    $region19: #{clf_differential_tree_forward.1} parent=1 // pred_check_branch
      %59 = sbr.rel (0) target = $region21
    $region20: #{clf_differential_tree_forward.1} parent=1 // pred_region
      %s61 = ssub.s32 8192, 8192
      %62 = vsyncadd [#allocation8], %s61
      %s63 = sshll.u32 [#allocation9], 4
      %s64 = int_to_ptr.vmem [resolvable:$true] %s63
      %69 = dma.hbm_to_vmem [thread:$0]  %s4, 8192, %s64, [#allocation8], 128, 128, 8
    $region21: #{clf_differential_tree_forward.1} parent=1 // pred_fallthru
      _
    // Predicated region
    $region22: #{clf_differential_tree_forward.1} parent=1 // pred_check
      _
    $region23: #{clf_differential_tree_forward.1} parent=1 // pred_check_branch
      %71 = sbr.rel (0) target = $region25
    $region24: #{clf_differential_tree_forward.1} parent=1 // pred_region
      %s73 = ssub.s32 2048, 2048
      %74 = vsyncadd [#allocation11], %s73
      %s75 = sshll.u32 [#allocation10], 4
      %s76 = int_to_ptr.vmem [resolvable:$true] %s75
      %81 = dma.hbm_to_vmem [thread:$0]  %s5, 2048, %s76, [#allocation11], 128, 128, 8
    $region25: #{clf_differential_tree_forward.1} parent=1 // pred_fallthru
      _
    // Predicated region
    $region26: #{clf_differential_tree_forward.1} parent=1 // pred_check
      _
    $region27: #{clf_differential_tree_forward.1} parent=1 // pred_check_branch
      %83 = sbr.rel (0) target = $region29
    $region28: #{clf_differential_tree_forward.1} parent=1 // pred_region
      %s85 = ssub.s32 1024, 1024
      %86 = vsyncadd [#allocation11], %s85
      %s88 = sshll.u32 [#allocation12], 4
      %s89 = int_to_ptr.vmem [resolvable:$true] %s88
      %91 = dma.hbm_to_vmem [thread:$0]  %s6, 1024, %s89, [#allocation11]
    $region29: #{clf_differential_tree_forward.1} parent=1 // pred_fallthru
      _
    // Predicated region
    $region30: #{clf_differential_tree_forward.1} parent=1 // pred_check
      _
    $region31: #{clf_differential_tree_forward.1} parent=1 // pred_check_branch
      %93 = sbr.rel (0) target = $region33
    $region32: #{clf_differential_tree_forward.1} parent=1 // pred_region
      %94 = dma.done [#allocation3], 128
    $region33: #{clf_differential_tree_forward.1} parent=1 // pred_fallthru
      _
    // Predicated region
    $region34: #{clf_differential_tree_forward.1} parent=1 // pred_check
      _
    $region35: #{clf_differential_tree_forward.1} parent=1 // pred_check_branch
      %96 = sbr.rel (0) target = $region37
    $region36: #{clf_differential_tree_forward.1} parent=1 // pred_region
      %97 = dma.done [#allocation5], 1024
    $region37: #{clf_differential_tree_forward.1} parent=1 // pred_fallthru
      _
    // Predicated region
    $region38: #{clf_differential_tree_forward.1} parent=1 // pred_check
      _
    $region39: #{clf_differential_tree_forward.1} parent=1 // pred_check_branch
      %99 = sbr.rel (0) target = $region41
    $region40: #{clf_differential_tree_forward.1} parent=1 // pred_region
      %100 = dma.done [#allocation5], 16384
    $region41: #{clf_differential_tree_forward.1} parent=1 // pred_fallthru
      _
    // Predicated region
    $region42: #{clf_differential_tree_forward.1} parent=1 // pred_check
      _
    $region43: #{clf_differential_tree_forward.1} parent=1 // pred_check_branch
      %102 = sbr.rel (0) target = $region45
    $region44: #{clf_differential_tree_forward.1} parent=1 // pred_region
      %103 = dma.done [#allocation8], 128
    $region45: #{clf_differential_tree_forward.1} parent=1 // pred_fallthru
      _
    // Predicated region
    $region46: #{clf_differential_tree_forward.1} parent=1 // pred_check
      _
    $region47: #{clf_differential_tree_forward.1} parent=1 // pred_check_branch
      %105 = sbr.rel (0) target = $region49
    $region48: #{clf_differential_tree_forward.1} parent=1 // pred_region
      %106 = dma.done [#allocation8], 8192
    $region49: #{clf_differential_tree_forward.1} parent=1 // pred_fallthru
      _
    // Predicated region
    $region50: #{clf_differential_tree_forward.1} parent=1 // pred_check
      _
    $region51: #{clf_differential_tree_forward.1} parent=1 // pred_check_branch
      %108 = sbr.rel (0) target = $region53
    $region52: #{clf_differential_tree_forward.1} parent=1 // pred_region
      %109 = dma.done [#allocation11], 2048
    $region53: #{clf_differential_tree_forward.1} parent=1 // pred_fallthru
      _
    // Predicated region
    $region54: #{clf_differential_tree_forward.1} parent=1 // pred_check
      _
    $region55: #{clf_differential_tree_forward.1} parent=1 // pred_check_branch
      %111 = sbr.rel (0) target = $region57
    $region56: #{clf_differential_tree_forward.1} parent=1 // pred_region
      %112 = dma.done [#allocation11], 1024
    $region57: #{clf_differential_tree_forward.1} parent=1 // pred_fallthru
      _
    %v113 = vld [vmem:[#allocation2] sm:$0xff]
    %v114 = vld [vmem:[#allocation12] ss:$8 sm:$0xf]
    %v115 = vld [vmem:[#allocation12] ss:$8 sm:$0xf0]
    %v116 = vor.u32 %v114, %v115
    %s117 = scalar_lea.vmem [#allocation12], 1
    %v118 = vld [vmem:[%s117] ss:$8 sm:$0xf]
    %v119 = vld [vmem:[%s117] ss:$8 sm:$0xf0]
    %v120 = vor.u32 %v118, %v119
    %s121 = scalar_lea.vmem [#allocation12], 2
    %v122 = vld [vmem:[%s121] ss:$8 sm:$0xf]
    %v123 = vld [vmem:[%s121] ss:$8 sm:$0xf0]
    %v124 = vor.u32 %v122, %v123
    %s125 = scalar_lea.vmem [#allocation12], 3
    %v126 = vld [vmem:[%s125] ss:$8 sm:$0xf]
    %v127 = vld [vmem:[%s125] ss:$8 sm:$0xf0]
    %v128 = vor.u32 %v126, %v127
    %v129 = vld [vmem:[#allocation4] sm:$0xff]
    %v130 = vld [vmem:[#allocation4 + $0x8] sm:$0xff]
    %v131 = vld [vmem:[#allocation4 + $0x10] sm:$0xff]
    %v132 = vld [vmem:[#allocation4 + $0x18] sm:$0xff]
    %v133 = vld [vmem:[#allocation4 + $0x20] sm:$0xff]
    %v134 = vld [vmem:[#allocation4 + $0x28] sm:$0xff]
    %v135 = vld [vmem:[#allocation4 + $0x30] sm:$0xff]
    %v136 = vld [vmem:[#allocation4 + $0x38] sm:$0xff]
    %vm137 = vcmask 64512
    %v139 = vsel %vm137, %v113, 0
    %141 = vmatprep.subr.mxu0 0.0
    %142 = vmatpush1.msra.mxu0 0.0
    %143 = vmatprep.subr.mxu0 0.0
    %144 = vmatpush1.msra.mxu0 0.0
    %145 = vmatprep.subr.mxu0 0.0
    %146 = vmatpush1.msra.mxu0 0.0
    %147 = vmatprep.subr.mxu0 0.0
    %148 = vmatpush1.msra.mxu0 0.0
    %149 = vmatprep.subr.mxu0 0.0
    %150 = vmatpush1.msra.mxu0 0.0
    %151 = vmatprep.subr.mxu0 0.0
    %152 = vmatpush1.msra.mxu0 0.0
    %153 = vmatprep.subr.mxu0 0.0
    %154 = vmatpush1.msra.mxu0 0.0
    %155 = vmatprep.subr.mxu0 0.0
    %156 = vmatpush1.msra.mxu0 0.0
    %157 = vmatprep.subr.mxu0 0.0
    %158 = vmatpush1.msra.mxu0 0.0
    %159 = vmatprep.subr.mxu0 0.0
    %160 = vmatpush1.msra.mxu0 0.0
    %161 = vmatprep.subr.mxu0 0.0
    %162 = vmatpush1.msra.mxu0 0.0
    %163 = vmatprep.subr.mxu0 0.0
    %164 = vmatpush1.msra.mxu0 0.0
    %165 = vmatprep.subr.mxu0 0.0
    %166 = vmatpush1.msra.mxu0 0.0
    %167 = vmatprep.subr.mxu0 0.0
    %168 = vmatpush1.msra.mxu0 0.0
    %169 = vmatprep.subr.mxu0 0.0
    %170 = vmatpush1.msra.mxu0 0.0
    %171 = vmatprep.subr.mxu0 %v130
    %172 = vmatpush1.msra.mxu0 %v129
    %173 = vmatprep.subr.mxu0 0.0
    %174 = vmatpush2.msra.mxu0 0.0
    %175 = vmatprep.subr.mxu0 0.0
    %176 = vmatpush2.msra.mxu0 0.0
    %177 = vmatprep.subr.mxu0 0.0
    %178 = vmatpush2.msra.mxu0 0.0
    %179 = vmatprep.subr.mxu0 0.0
    %180 = vmatpush2.msra.mxu0 0.0
    %181 = vmatprep.subr.mxu0 0.0
    %182 = vmatpush2.msra.mxu0 0.0
    %183 = vmatprep.subr.mxu0 0.0
    %184 = vmatpush2.msra.mxu0 0.0
    %185 = vmatprep.subr.mxu0 0.0
    %186 = vmatpush2.msra.mxu0 0.0
    %187 = vmatprep.subr.mxu0 0.0
    %188 = vmatpush2.msra.mxu0 0.0
    %189 = vmatprep.subr.mxu0 0.0
    %190 = vmatpush2.msra.mxu0 0.0
    %191 = vmatprep.subr.mxu0 0.0
    %192 = vmatpush2.msra.mxu0 0.0
    %193 = vmatprep.subr.mxu0 0.0
    %194 = vmatpush2.msra.mxu0 0.0
    %195 = vmatprep.subr.mxu0 0.0
    %196 = vmatpush2.msra.mxu0 0.0
    %197 = vmatprep.subr.mxu0 0.0
    %198 = vmatpush2.msra.mxu0 0.0
    %199 = vmatprep.subr.mxu0 0.0
    %200 = vmatpush2.msra.mxu0 0.0
    %201 = vmatprep.subr.mxu0 0.0
    %202 = vmatpush2.msra.mxu0 0.0
    %203 = vmatprep.subr.mxu0 0.0
    %204 = vmatpush2.msra.mxu0 0.0
    %205 = vmatprep.mubr.f32.mxu0 0.0
    %206 = vmatmul.mubr.f32.gmra.mxu0 %v139
    %v207 = vpop.f32.mrf.mxu0
    %v208 = vadd.f32 0.0, %v207
    %v209 = vpop.f32.mrf.mxu0
    %v210 = vadd.f32 0.0, %v209
    %211 = vdwg.mxu0
    %212 = vmatprep.subr.mxu0 0.0
    %213 = vmatpush1.msra.mxu0 0.0
    %214 = vmatprep.subr.mxu0 0.0
    %215 = vmatpush1.msra.mxu0 0.0
    %216 = vmatprep.subr.mxu0 0.0
    %217 = vmatpush1.msra.mxu0 0.0
    %218 = vmatprep.subr.mxu0 0.0
    %219 = vmatpush1.msra.mxu0 0.0
    %220 = vmatprep.subr.mxu0 0.0
    %221 = vmatpush1.msra.mxu0 0.0
    %222 = vmatprep.subr.mxu0 0.0
    %223 = vmatpush1.msra.mxu0 0.0
    %224 = vmatprep.subr.mxu0 0.0
    %225 = vmatpush1.msra.mxu0 0.0
    %226 = vmatprep.subr.mxu0 0.0
    %227 = vmatpush1.msra.mxu0 0.0
    %228 = vmatprep.subr.mxu0 0.0
    %229 = vmatpush1.msra.mxu0 0.0
    %230 = vmatprep.subr.mxu0 0.0
    %231 = vmatpush1.msra.mxu0 0.0
    %232 = vmatprep.subr.mxu0 0.0
    %233 = vmatpush1.msra.mxu0 0.0
    %234 = vmatprep.subr.mxu0 0.0
    %235 = vmatpush1.msra.mxu0 0.0
    %236 = vmatprep.subr.mxu0 0.0
    %237 = vmatpush1.msra.mxu0 0.0
    %238 = vmatprep.subr.mxu0 0.0
    %239 = vmatpush1.msra.mxu0 0.0
    %240 = vmatprep.subr.mxu0 0.0
    %241 = vmatpush1.msra.mxu0 0.0
    %242 = vmatprep.subr.mxu0 %v132
    %243 = vmatpush1.msra.mxu0 %v131
    %244 = vmatprep.subr.mxu0 0.0
    %245 = vmatpush2.msra.mxu0 0.0
    %246 = vmatprep.subr.mxu0 0.0
    %247 = vmatpush2.msra.mxu0 0.0
    %248 = vmatprep.subr.mxu0 0.0
    %249 = vmatpush2.msra.mxu0 0.0
    %250 = vmatprep.subr.mxu0 0.0
    %251 = vmatpush2.msra.mxu0 0.0
    %252 = vmatprep.subr.mxu0 0.0
    %253 = vmatpush2.msra.mxu0 0.0
    %254 = vmatprep.subr.mxu0 0.0
    %255 = vmatpush2.msra.mxu0 0.0
    %256 = vmatprep.subr.mxu0 0.0
    %257 = vmatpush2.msra.mxu0 0.0
    %258 = vmatprep.subr.mxu0 0.0
    %259 = vmatpush2.msra.mxu0 0.0
    %260 = vmatprep.subr.mxu0 0.0
    %261 = vmatpush2.msra.mxu0 0.0
    %262 = vmatprep.subr.mxu0 0.0
    %263 = vmatpush2.msra.mxu0 0.0
    %264 = vmatprep.subr.mxu0 0.0
    %265 = vmatpush2.msra.mxu0 0.0
    %266 = vmatprep.subr.mxu0 0.0
    %267 = vmatpush2.msra.mxu0 0.0
    %268 = vmatprep.subr.mxu0 0.0
    %269 = vmatpush2.msra.mxu0 0.0
    %270 = vmatprep.subr.mxu0 0.0
    %271 = vmatpush2.msra.mxu0 0.0
    %272 = vmatprep.subr.mxu0 0.0
    %273 = vmatpush2.msra.mxu0 0.0
    %274 = vmatprep.subr.mxu0 0.0
    %275 = vmatpush2.msra.mxu0 0.0
    %276 = vmatprep.mubr.f32.mxu0 0.0
    %277 = vmatmul.mubr.f32.gmra.mxu0 %v139
    %v278 = vpop.f32.mrf.mxu0
    %v279 = vadd.f32 0.0, %v278
    %v280 = vpop.f32.mrf.mxu0
    %v281 = vadd.f32 0.0, %v280
    %282 = vdwg.mxu0
    %283 = vmatprep.subr.mxu0 0.0
    %284 = vmatpush1.msra.mxu0 0.0
    %285 = vmatprep.subr.mxu0 0.0
    %286 = vmatpush1.msra.mxu0 0.0
    %287 = vmatprep.subr.mxu0 0.0
    %288 = vmatpush1.msra.mxu0 0.0
    %289 = vmatprep.subr.mxu0 0.0
    %290 = vmatpush1.msra.mxu0 0.0
    %291 = vmatprep.subr.mxu0 0.0
    %292 = vmatpush1.msra.mxu0 0.0
    %293 = vmatprep.subr.mxu0 0.0
    %294 = vmatpush1.msra.mxu0 0.0
    %295 = vmatprep.subr.mxu0 0.0
    %296 = vmatpush1.msra.mxu0 0.0
    %297 = vmatprep.subr.mxu0 0.0
    %298 = vmatpush1.msra.mxu0 0.0
    %299 = vmatprep.subr.mxu0 0.0
    %300 = vmatpush1.msra.mxu0 0.0
    %301 = vmatprep.subr.mxu0 0.0
    %302 = vmatpush1.msra.mxu0 0.0
    %303 = vmatprep.subr.mxu0 0.0
    %304 = vmatpush1.msra.mxu0 0.0
    %305 = vmatprep.subr.mxu0 0.0
    %306 = vmatpush1.msra.mxu0 0.0
    %307 = vmatprep.subr.mxu0 0.0
    %308 = vmatpush1.msra.mxu0 0.0
    %309 = vmatprep.subr.mxu0 0.0
    %310 = vmatpush1.msra.mxu0 0.0
    %311 = vmatprep.subr.mxu0 0.0
    %312 = vmatpush1.msra.mxu0 0.0
    %313 = vmatprep.subr.mxu0 %v134
    %314 = vmatpush1.msra.mxu0 %v133
    %315 = vmatprep.subr.mxu0 0.0
    %316 = vmatpush2.msra.mxu0 0.0
    %317 = vmatprep.subr.mxu0 0.0
    %318 = vmatpush2.msra.mxu0 0.0
    %319 = vmatprep.subr.mxu0 0.0
    %320 = vmatpush2.msra.mxu0 0.0
    %321 = vmatprep.subr.mxu0 0.0
    %322 = vmatpush2.msra.mxu0 0.0
    %323 = vmatprep.subr.mxu0 0.0
    %324 = vmatpush2.msra.mxu0 0.0
    %325 = vmatprep.subr.mxu0 0.0
    %326 = vmatpush2.msra.mxu0 0.0
    %327 = vmatprep.subr.mxu0 0.0
    %328 = vmatpush2.msra.mxu0 0.0
    %329 = vmatprep.subr.mxu0 0.0
    %330 = vmatpush2.msra.mxu0 0.0
    %331 = vmatprep.subr.mxu0 0.0
    %332 = vmatpush2.msra.mxu0 0.0
    %333 = vmatprep.subr.mxu0 0.0
    %334 = vmatpush2.msra.mxu0 0.0
    %335 = vmatprep.subr.mxu0 0.0
    %336 = vmatpush2.msra.mxu0 0.0
    %337 = vmatprep.subr.mxu0 0.0
    %338 = vmatpush2.msra.mxu0 0.0
    %339 = vmatprep.subr.mxu0 0.0
    %340 = vmatpush2.msra.mxu0 0.0
    %341 = vmatprep.subr.mxu0 0.0
    %342 = vmatpush2.msra.mxu0 0.0
    %343 = vmatprep.subr.mxu0 0.0
    %344 = vmatpush2.msra.mxu0 0.0
    %345 = vmatprep.subr.mxu0 0.0
    %346 = vmatpush2.msra.mxu0 0.0
    %347 = vmatprep.mubr.f32.mxu0 0.0
    %348 = vmatmul.mubr.f32.gmra.mxu0 %v139
    %v349 = vpop.f32.mrf.mxu0
    %v350 = vadd.f32 0.0, %v349
    %v351 = vpop.f32.mrf.mxu0
    %v352 = vadd.f32 0.0, %v351
    %353 = vdwg.mxu0
    %354 = vmatprep.subr.mxu0 0.0
    %355 = vmatpush1.msra.mxu0 0.0
    %356 = vmatprep.subr.mxu0 0.0
    %357 = vmatpush1.msra.mxu0 0.0
    %358 = vmatprep.subr.mxu0 0.0
    %359 = vmatpush1.msra.mxu0 0.0
    %360 = vmatprep.subr.mxu0 0.0
    %361 = vmatpush1.msra.mxu0 0.0
    %362 = vmatprep.subr.mxu0 0.0
    %363 = vmatpush1.msra.mxu0 0.0
    %364 = vmatprep.subr.mxu0 0.0
    %365 = vmatpush1.msra.mxu0 0.0
    %366 = vmatprep.subr.mxu0 0.0
    %367 = vmatpush1.msra.mxu0 0.0
    %368 = vmatprep.subr.mxu0 0.0
    %369 = vmatpush1.msra.mxu0 0.0
    %370 = vmatprep.subr.mxu0 0.0
    %371 = vmatpush1.msra.mxu0 0.0
    %372 = vmatprep.subr.mxu0 0.0
    %373 = vmatpush1.msra.mxu0 0.0
    %374 = vmatprep.subr.mxu0 0.0
    %375 = vmatpush1.msra.mxu0 0.0
    %376 = vmatprep.subr.mxu0 0.0
    %377 = vmatpush1.msra.mxu0 0.0
    %378 = vmatprep.subr.mxu0 0.0
    %379 = vmatpush1.msra.mxu0 0.0
    %380 = vmatprep.subr.mxu0 0.0
    %381 = vmatpush1.msra.mxu0 0.0
    %382 = vmatprep.subr.mxu0 0.0
    %383 = vmatpush1.msra.mxu0 0.0
    %384 = vmatprep.subr.mxu0 %v136
    %385 = vmatpush1.msra.mxu0 %v135
    %386 = vmatprep.subr.mxu0 0.0
    %387 = vmatpush2.msra.mxu0 0.0
    %388 = vmatprep.subr.mxu0 0.0
    %389 = vmatpush2.msra.mxu0 0.0
    %390 = vmatprep.subr.mxu0 0.0
    %391 = vmatpush2.msra.mxu0 0.0
    %392 = vmatprep.subr.mxu0 0.0
    %393 = vmatpush2.msra.mxu0 0.0
    %394 = vmatprep.subr.mxu0 0.0
    %395 = vmatpush2.msra.mxu0 0.0
    %396 = vmatprep.subr.mxu0 0.0
    %397 = vmatpush2.msra.mxu0 0.0
    %398 = vmatprep.subr.mxu0 0.0
    %399 = vmatpush2.msra.mxu0 0.0
    %400 = vmatprep.subr.mxu0 0.0
    %401 = vmatpush2.msra.mxu0 0.0
    %402 = vmatprep.subr.mxu0 0.0
    %403 = vmatpush2.msra.mxu0 0.0
    %404 = vmatprep.subr.mxu0 0.0
    %405 = vmatpush2.msra.mxu0 0.0
    %406 = vmatprep.subr.mxu0 0.0
    %407 = vmatpush2.msra.mxu0 0.0
    %408 = vmatprep.subr.mxu0 0.0
    %409 = vmatpush2.msra.mxu0 0.0
    %410 = vmatprep.subr.mxu0 0.0
    %411 = vmatpush2.msra.mxu0 0.0
    %412 = vmatprep.subr.mxu0 0.0
    %413 = vmatpush2.msra.mxu0 0.0
    %414 = vmatprep.subr.mxu0 0.0
    %415 = vmatpush2.msra.mxu0 0.0
    %416 = vmatprep.subr.mxu0 0.0
    %417 = vmatpush2.msra.mxu0 0.0
    %418 = vmatprep.mubr.f32.mxu0 0.0
    %419 = vmatmul.mubr.f32.gmra.mxu0 %v139
    %v420 = vpop.f32.mrf.mxu0
    %v421 = vadd.f32 0.0, %v420
    %v422 = vpop.f32.mrf.mxu0
    %v423 = vadd.f32 0.0, %v422
    %424 = vdwg.mxu0
    %v426 = vlaneseq
    %v427 = vshrl.u32 %v426, 7
    %v428 = vsub.s32 0, %v427
    %v429 = vrot.slane %v116, %v428
    %v430 = vlaneseq
    %v431 = vshrl.u32 %v430, 7
    %v432 = vsub.s32 1, %v431
    %v433 = vrot.slane %v116, %v432
    %v434 = vlaneseq
    %v435 = vshrl.u32 %v434, 7
    %v436 = vsub.s32 2, %v435
    %v437 = vrot.slane %v116, %v436
    %v438 = vlaneseq
    %v439 = vshrl.u32 %v438, 7
    %v440 = vsub.s32 3, %v439
    %v441 = vrot.slane %v116, %v440
    %v442 = vlaneseq
    %v443 = vshrl.u32 %v442, 7
    %v444 = vsub.s32 4, %v443
    %v445 = vrot.slane %v116, %v444
    %v446 = vlaneseq
    %v447 = vshrl.u32 %v446, 7
    %v448 = vsub.s32 5, %v447
    %v449 = vrot.slane %v116, %v448
    %v450 = vlaneseq
    %v451 = vshrl.u32 %v450, 7
    %v452 = vsub.s32 6, %v451
    %v453 = vrot.slane %v116, %v452
    %v454 = vlaneseq
    %v455 = vshrl.u32 %v454, 7
    %v456 = vsub.s32 7, %v455
    %v457 = vrot.slane %v116, %v456
    %v466 = vmul.f32 %v208, %v429
    %v467 = vmul.f32 %v210, %v433
    %v468 = vmul.f32 %v279, %v437
    %v469 = vmul.f32 %v281, %v441
    %v470 = vmul.f32 %v350, %v445
    %v471 = vmul.f32 %v352, %v449
    %v472 = vmul.f32 %v421, %v453
    %v473 = vmul.f32 %v423, %v457
    %v475 = vlaneseq
    %v476 = vshrl.u32 %v475, 7
    %v477 = vsub.s32 0, %v476
    %v478 = vrot.slane %v120, %v477
    %v479 = vlaneseq
    %v480 = vshrl.u32 %v479, 7
    %v481 = vsub.s32 1, %v480
    %v482 = vrot.slane %v120, %v481
    %v483 = vlaneseq
    %v484 = vshrl.u32 %v483, 7
    %v485 = vsub.s32 2, %v484
    %v486 = vrot.slane %v120, %v485
    %v487 = vlaneseq
    %v488 = vshrl.u32 %v487, 7
    %v489 = vsub.s32 3, %v488
    %v490 = vrot.slane %v120, %v489
    %v491 = vlaneseq
    %v492 = vshrl.u32 %v491, 7
    %v493 = vsub.s32 4, %v492
    %v494 = vrot.slane %v120, %v493
    %v495 = vlaneseq
    %v496 = vshrl.u32 %v495, 7
    %v497 = vsub.s32 5, %v496
    %v498 = vrot.slane %v120, %v497
    %v499 = vlaneseq
    %v500 = vshrl.u32 %v499, 7
    %v501 = vsub.s32 6, %v500
    %v502 = vrot.slane %v120, %v501
    %v503 = vlaneseq
    %v504 = vshrl.u32 %v503, 7
    %v505 = vsub.s32 7, %v504
    %v506 = vrot.slane %v120, %v505
    %v515 = vadd.f32 %v466, %v478
    %v516 = vadd.f32 %v467, %v482
    %v517 = vadd.f32 %v468, %v486
    %v518 = vadd.f32 %v469, %v490
    %v519 = vadd.f32 %v470, %v494
    %v520 = vadd.f32 %v471, %v498
    %v521 = vadd.f32 %v472, %v502
    %v522 = vadd.f32 %v473, %v506
    %v523 = vmax.f32 %v515, 0.0
    %v524 = vmax.f32 %v516, 0.0
    %v525 = vmax.f32 %v517, 0.0
    %v526 = vmax.f32 %v518, 0.0
    %v527 = vmax.f32 %v519, 0.0
    %v528 = vmax.f32 %v520, 0.0
    %v529 = vmax.f32 %v521, 0.0
    %v530 = vmax.f32 %v522, 0.0
    %v531 = vmin.f32 %v523, 1.0
    %v532 = vmin.f32 %v524, 1.0
    %v533 = vmin.f32 %v525, 1.0
    %v534 = vmin.f32 %v526, 1.0
    %v535 = vmin.f32 %v527, 1.0
    %v536 = vmin.f32 %v528, 1.0
    %v537 = vmin.f32 %v529, 1.0
    %v538 = vmin.f32 %v530, 1.0
    %v539 = vmul.f32 %v531, %v533
    %v540 = vmul.f32 %v532, %v534
    %v541 = vmul.f32 %v539, %v535
    %v542 = vmul.f32 %v540, %v536
    %v543 = vmul.f32 %v541, %v537
    %v544 = vmul.f32 %v542, %v538
    %v545 = vld [vmem:[#allocation9] sm:$0xff]
    %v546 = vld [vmem:[#allocation9 + $0x8] sm:$0xff]
    %v547 = vld [vmem:[#allocation9 + $0x10] sm:$0xff]
    %v548 = vld [vmem:[#allocation9 + $0x18] sm:$0xff]
    %v549 = vld [vmem:[#allocation9 + $0x20] sm:$0xff]
    %v550 = vld [vmem:[#allocation9 + $0x28] sm:$0xff]
    %v551 = vld [vmem:[#allocation9 + $0x30] sm:$0xff]
    %v552 = vld [vmem:[#allocation9 + $0x38] sm:$0xff]
    %v553 = vld [vmem:[#allocation9 + $0x40] sm:$0xff]
    %v554 = vld [vmem:[#allocation9 + $0x48] sm:$0xff]
    %v555 = vld [vmem:[#allocation9 + $0x50] sm:$0xff]
    %v556 = vld [vmem:[#allocation9 + $0x58] sm:$0xff]
    %v557 = vld [vmem:[#allocation9 + $0x60] sm:$0xff]
    %v558 = vld [vmem:[#allocation9 + $0x68] sm:$0xff]
    %v559 = vld [vmem:[#allocation9 + $0x70] sm:$0xff]
    %v560 = vld [vmem:[#allocation9 + $0x78] sm:$0xff]
    %v561 = vld [vmem:[#allocation9 + $0x80] sm:$0xff]
    %v562 = vld [vmem:[#allocation9 + $0x88] sm:$0xff]
    %v563 = vld [vmem:[#allocation9 + $0x90] sm:$0xff]
    %v564 = vld [vmem:[#allocation9 + $0x98] sm:$0xff]
    %v565 = vld [vmem:[#allocation9 + $0xa0] sm:$0xff]
    %v566 = vld [vmem:[#allocation9 + $0xa8] sm:$0xff]
    %v567 = vld [vmem:[#allocation9 + $0xb0] sm:$0xff]
    %v568 = vld [vmem:[#allocation9 + $0xb8] sm:$0xff]
    %v569 = vld [vmem:[#allocation9 + $0xc0] sm:$0xff]
    %v570 = vld [vmem:[#allocation9 + $0xc8] sm:$0xff]
    %v571 = vld [vmem:[#allocation9 + $0xd0] sm:$0xff]
    %v572 = vld [vmem:[#allocation9 + $0xd8] sm:$0xff]
    %v573 = vld [vmem:[#allocation9 + $0xe0] sm:$0xff]
    %v574 = vld [vmem:[#allocation9 + $0xe8] sm:$0xff]
    %v575 = vld [vmem:[#allocation9 + $0xf0] sm:$0xff]
    %v576 = vld [vmem:[#allocation9 + $0xf8] sm:$0xff]
    %v577 = vld [vmem:[#allocation7] sm:$0xff]
    %578 = vmatprep.subr.mxu0 0.0
    %579 = vmatpush1.msra.mxu0 0.0
    %580 = vmatprep.subr.mxu0 0.0
    %581 = vmatpush1.msra.mxu0 0.0
    %582 = vmatprep.subr.mxu0 0.0
    %583 = vmatpush1.msra.mxu0 0.0
    %584 = vmatprep.subr.mxu0 0.0
    %585 = vmatpush1.msra.mxu0 0.0
    %586 = vmatprep.subr.mxu0 0.0
    %587 = vmatpush1.msra.mxu0 0.0
    %588 = vmatprep.subr.mxu0 0.0
    %589 = vmatpush1.msra.mxu0 0.0
    %590 = vmatprep.subr.mxu0 0.0
    %591 = vmatpush1.msra.mxu0 0.0
    %592 = vmatprep.subr.mxu0 0.0
    %593 = vmatpush1.msra.mxu0 0.0
    %594 = vmatprep.subr.mxu0 0.0
    %595 = vmatpush1.msra.mxu0 0.0
    %596 = vmatprep.subr.mxu0 0.0
    %597 = vmatpush1.msra.mxu0 0.0
    %598 = vmatprep.subr.mxu0 0.0
    %599 = vmatpush1.msra.mxu0 0.0
    %600 = vmatprep.subr.mxu0 0.0
    %601 = vmatpush1.msra.mxu0 0.0
    %602 = vmatprep.subr.mxu0 0.0
    %603 = vmatpush1.msra.mxu0 0.0
    %604 = vmatprep.subr.mxu0 0.0
    %605 = vmatpush1.msra.mxu0 0.0
    %606 = vmatprep.subr.mxu0 0.0
    %607 = vmatpush1.msra.mxu0 0.0
    %608 = vmatprep.subr.mxu0 0.0
    %609 = vmatpush1.msra.mxu0 %v577
    %610 = vmatprep.subr.mxu0 0.0
    %611 = vmatpush2.msra.mxu0 0.0
    %612 = vmatprep.subr.mxu0 0.0
    %613 = vmatpush2.msra.mxu0 0.0
    %614 = vmatprep.subr.mxu0 0.0
    %615 = vmatpush2.msra.mxu0 0.0
    %616 = vmatprep.subr.mxu0 0.0
    %617 = vmatpush2.msra.mxu0 0.0
    %618 = vmatprep.subr.mxu0 0.0
    %619 = vmatpush2.msra.mxu0 0.0
    %620 = vmatprep.subr.mxu0 0.0
    %621 = vmatpush2.msra.mxu0 0.0
    %622 = vmatprep.subr.mxu0 0.0
    %623 = vmatpush2.msra.mxu0 0.0
    %624 = vmatprep.subr.mxu0 0.0
    %625 = vmatpush2.msra.mxu0 0.0
    %626 = vmatprep.subr.mxu0 0.0
    %627 = vmatpush2.msra.mxu0 0.0
    %628 = vmatprep.subr.mxu0 0.0
    %629 = vmatpush2.msra.mxu0 0.0
    %630 = vmatprep.subr.mxu0 0.0
    %631 = vmatpush2.msra.mxu0 0.0
    %632 = vmatprep.subr.mxu0 0.0
    %633 = vmatpush2.msra.mxu0 0.0
    %634 = vmatprep.subr.mxu0 0.0
    %635 = vmatpush2.msra.mxu0 0.0
    %636 = vmatprep.subr.mxu0 0.0
    %637 = vmatpush2.msra.mxu0 0.0
    %638 = vmatprep.subr.mxu0 0.0
    %639 = vmatpush2.msra.mxu0 0.0
    %640 = vmatprep.subr.mxu0 0.0
    %641 = vmatpush2.msra.mxu0 0.0
    %642 = vmatprep.mubr.f32.mxu0 0.0
    %643 = vmatmul.mubr.f32.gmra.mxu0 %v139
    %v644 = vpop.f32.mrf.mxu0
    %v645 = vadd.f32 0.0, %v644
    %v646 = vpop.f32.mrf.mxu0
    %647 = vdwg.mxu0
    %648 = vmatprep.subr.mxu0 0.0
    %649 = vmatpush1.msra.mxu0 %v560
    %650 = vmatprep.subr.mxu0 0.0
    %651 = vmatpush1.msra.mxu0 %v559
    %652 = vmatprep.subr.mxu0 0.0
    %653 = vmatpush1.msra.mxu0 %v558
    %654 = vmatprep.subr.mxu0 0.0
    %655 = vmatpush1.msra.mxu0 %v557
    %656 = vmatprep.subr.mxu0 0.0
    %657 = vmatpush1.msra.mxu0 %v556
    %658 = vmatprep.subr.mxu0 0.0
    %659 = vmatpush1.msra.mxu0 %v555
    %660 = vmatprep.subr.mxu0 0.0
    %661 = vmatpush1.msra.mxu0 %v554
    %662 = vmatprep.subr.mxu0 0.0
    %663 = vmatpush1.msra.mxu0 %v553
    %664 = vmatprep.subr.mxu0 0.0
    %665 = vmatpush1.msra.mxu0 %v552
    %666 = vmatprep.subr.mxu0 0.0
    %667 = vmatpush1.msra.mxu0 %v551
    %668 = vmatprep.subr.mxu0 0.0
    %669 = vmatpush1.msra.mxu0 %v550
    %670 = vmatprep.subr.mxu0 0.0
    %671 = vmatpush1.msra.mxu0 %v549
    %672 = vmatprep.subr.mxu0 0.0
    %673 = vmatpush1.msra.mxu0 %v548
    %674 = vmatprep.subr.mxu0 0.0
    %675 = vmatpush1.msra.mxu0 %v547
    %676 = vmatprep.subr.mxu0 0.0
    %677 = vmatpush1.msra.mxu0 %v546
    %678 = vmatprep.subr.mxu0 0.0
    %679 = vmatpush1.msra.mxu0 %v545
    %680 = vmatprep.subr.mxu0 0.0
    %681 = vmatpush2.msra.mxu0 %v576
    %682 = vmatprep.subr.mxu0 0.0
    %683 = vmatpush2.msra.mxu0 %v575
    %684 = vmatprep.subr.mxu0 0.0
    %685 = vmatpush2.msra.mxu0 %v574
    %686 = vmatprep.subr.mxu0 0.0
    %687 = vmatpush2.msra.mxu0 %v573
    %688 = vmatprep.subr.mxu0 0.0
    %689 = vmatpush2.msra.mxu0 %v572
    %690 = vmatprep.subr.mxu0 0.0
    %691 = vmatpush2.msra.mxu0 %v571
    %692 = vmatprep.subr.mxu0 0.0
    %693 = vmatpush2.msra.mxu0 %v570
    %694 = vmatprep.subr.mxu0 0.0
    %695 = vmatpush2.msra.mxu0 %v569
    %696 = vmatprep.subr.mxu0 0.0
    %697 = vmatpush2.msra.mxu0 %v568
    %698 = vmatprep.subr.mxu0 0.0
    %699 = vmatpush2.msra.mxu0 %v567
    %700 = vmatprep.subr.mxu0 0.0
    %701 = vmatpush2.msra.mxu0 %v566
    %702 = vmatprep.subr.mxu0 0.0
    %703 = vmatpush2.msra.mxu0 %v565
    %704 = vmatprep.subr.mxu0 0.0
    %705 = vmatpush2.msra.mxu0 %v564
    %706 = vmatprep.subr.mxu0 0.0
    %707 = vmatpush2.msra.mxu0 %v563
    %708 = vmatprep.subr.mxu0 0.0
    %709 = vmatpush2.msra.mxu0 %v562
    %710 = vmatprep.subr.mxu0 0.0
    %711 = vmatpush2.msra.mxu0 %v561
    %712 = vmatprep.mubr.f32.mxu0 %v544
    %713 = vmatmul.mubr.f32.gmra.mxu0 %v543
    %v714 = vpop.f32.mrf.mxu0
    %v715 = vadd.f32 %v645, %v714
    %v716 = vpop.f32.mrf.mxu0
    %717 = vdwg.mxu0
    %v718 = vld [vmem:[#allocation6] sm:$0xff]
    %v719 = vld [vmem:[#allocation6 + $0x8] sm:$0xff]
    %v720 = vld [vmem:[#allocation6 + $0x10] sm:$0xff]
    %v721 = vld [vmem:[#allocation6 + $0x18] sm:$0xff]
    %v722 = vld [vmem:[#allocation6 + $0x20] sm:$0xff]
    %v723 = vld [vmem:[#allocation6 + $0x28] sm:$0xff]
    %v724 = vld [vmem:[#allocation6 + $0x30] sm:$0xff]
    %v725 = vld [vmem:[#allocation6 + $0x38] sm:$0xff]
    %v726 = vld [vmem:[#allocation6 + $0x40] sm:$0xff]
    %v727 = vld [vmem:[#allocation6 + $0x48] sm:$0xff]
    %v728 = vld [vmem:[#allocation6 + $0x50] sm:$0xff]
    %v729 = vld [vmem:[#allocation6 + $0x58] sm:$0xff]
    %v730 = vld [vmem:[#allocation6 + $0x60] sm:$0xff]
    %v731 = vld [vmem:[#allocation6 + $0x68] sm:$0xff]
    %v732 = vld [vmem:[#allocation6 + $0x70] sm:$0xff]
    %v733 = vld [vmem:[#allocation6 + $0x78] sm:$0xff]
    %v734 = vld [vmem:[#allocation6 + $0x80] sm:$0xff]
    %v735 = vld [vmem:[#allocation6 + $0x88] sm:$0xff]
    %v736 = vld [vmem:[#allocation6 + $0x90] sm:$0xff]
    %v737 = vld [vmem:[#allocation6 + $0x98] sm:$0xff]
    %v738 = vld [vmem:[#allocation6 + $0xa0] sm:$0xff]
    %v739 = vld [vmem:[#allocation6 + $0xa8] sm:$0xff]
    %v740 = vld [vmem:[#allocation6 + $0xb0] sm:$0xff]
    %v741 = vld [vmem:[#allocation6 + $0xb8] sm:$0xff]
    %v742 = vld [vmem:[#allocation6 + $0xc0] sm:$0xff]
    %v743 = vld [vmem:[#allocation6 + $0xc8] sm:$0xff]
    %v744 = vld [vmem:[#allocation6 + $0xd0] sm:$0xff]
    %v745 = vld [vmem:[#allocation6 + $0xd8] sm:$0xff]
    %v746 = vld [vmem:[#allocation6 + $0xe0] sm:$0xff]
    %v747 = vld [vmem:[#allocation6 + $0xe8] sm:$0xff]
    %v748 = vld [vmem:[#allocation6 + $0xf0] sm:$0xff]
    %v749 = vld [vmem:[#allocation6 + $0xf8] sm:$0xff]
    %v750 = vld [vmem:[#allocation6 + $0x100] sm:$0xff]
    %v751 = vld [vmem:[#allocation6 + $0x108] sm:$0xff]
    %v752 = vld [vmem:[#allocation6 + $0x110] sm:$0xff]
    %v753 = vld [vmem:[#allocation6 + $0x118] sm:$0xff]
    %v754 = vld [vmem:[#allocation6 + $0x120] sm:$0xff]
    %v755 = vld [vmem:[#allocation6 + $0x128] sm:$0xff]
    %v756 = vld [vmem:[#allocation6 + $0x130] sm:$0xff]
    %v757 = vld [vmem:[#allocation6 + $0x138] sm:$0xff]
    %v758 = vld [vmem:[#allocation6 + $0x140] sm:$0xff]
    %v759 = vld [vmem:[#allocation6 + $0x148] sm:$0xff]
    %v760 = vld [vmem:[#allocation6 + $0x150] sm:$0xff]
    %v761 = vld [vmem:[#allocation6 + $0x158] sm:$0xff]
    %v762 = vld [vmem:[#allocation6 + $0x160] sm:$0xff]
    %v763 = vld [vmem:[#allocation6 + $0x168] sm:$0xff]
    %v764 = vld [vmem:[#allocation6 + $0x170] sm:$0xff]
    %v765 = vld [vmem:[#allocation6 + $0x178] sm:$0xff]
    %v766 = vld [vmem:[#allocation6 + $0x180] sm:$0xff]
    %v767 = vld [vmem:[#allocation6 + $0x188] sm:$0xff]
    %v768 = vld [vmem:[#allocation6 + $0x190] sm:$0xff]
    %v769 = vld [vmem:[#allocation6 + $0x198] sm:$0xff]
    %v770 = vld [vmem:[#allocation6 + $0x1a0] sm:$0xff]
    %v771 = vld [vmem:[#allocation6 + $0x1a8] sm:$0xff]
    %v772 = vld [vmem:[#allocation6 + $0x1b0] sm:$0xff]
    %v773 = vld [vmem:[#allocation6 + $0x1b8] sm:$0xff]
    %v774 = vld [vmem:[#allocation6 + $0x1c0] sm:$0xff]
    %v775 = vld [vmem:[#allocation6 + $0x1c8] sm:$0xff]
    %v776 = vld [vmem:[#allocation6 + $0x1d0] sm:$0xff]
    %v777 = vld [vmem:[#allocation6 + $0x1d8] sm:$0xff]
    %v778 = vld [vmem:[#allocation6 + $0x1e0] sm:$0xff]
    %v779 = vld [vmem:[#allocation6 + $0x1e8] sm:$0xff]
    %v780 = vld [vmem:[#allocation6 + $0x1f0] sm:$0xff]
    %v781 = vld [vmem:[#allocation6 + $0x1f8] sm:$0xff]
    %v782 = vld [vmem:[#allocation6 + $0x200] sm:$0xff]
    %v783 = vld [vmem:[#allocation6 + $0x208] sm:$0xff]
    %v784 = vld [vmem:[#allocation6 + $0x210] sm:$0xff]
    %v785 = vld [vmem:[#allocation6 + $0x218] sm:$0xff]
    %v786 = vld [vmem:[#allocation6 + $0x220] sm:$0xff]
    %v787 = vld [vmem:[#allocation6 + $0x228] sm:$0xff]
    %v788 = vld [vmem:[#allocation6 + $0x230] sm:$0xff]
    %v789 = vld [vmem:[#allocation6 + $0x238] sm:$0xff]
    %v790 = vld [vmem:[#allocation6 + $0x240] sm:$0xff]
    %v791 = vld [vmem:[#allocation6 + $0x248] sm:$0xff]
    %v792 = vld [vmem:[#allocation6 + $0x250] sm:$0xff]
    %v793 = vld [vmem:[#allocation6 + $0x258] sm:$0xff]
    %v794 = vld [vmem:[#allocation6 + $0x260] sm:$0xff]
    %v795 = vld [vmem:[#allocation6 + $0x268] sm:$0xff]
    %v796 = vld [vmem:[#allocation6 + $0x270] sm:$0xff]
    %v797 = vld [vmem:[#allocation6 + $0x278] sm:$0xff]
    %v798 = vld [vmem:[#allocation6 + $0x280] sm:$0xff]
    %v799 = vld [vmem:[#allocation6 + $0x288] sm:$0xff]
    %v800 = vld [vmem:[#allocation6 + $0x290] sm:$0xff]
    %v801 = vld [vmem:[#allocation6 + $0x298] sm:$0xff]
    %v802 = vld [vmem:[#allocation6 + $0x2a0] sm:$0xff]
    %v803 = vld [vmem:[#allocation6 + $0x2a8] sm:$0xff]
    %v804 = vld [vmem:[#allocation6 + $0x2b0] sm:$0xff]
    %v805 = vld [vmem:[#allocation6 + $0x2b8] sm:$0xff]
    %v806 = vld [vmem:[#allocation6 + $0x2c0] sm:$0xff]
    %v807 = vld [vmem:[#allocation6 + $0x2c8] sm:$0xff]
    %v808 = vld [vmem:[#allocation6 + $0x2d0] sm:$0xff]
    %v809 = vld [vmem:[#allocation6 + $0x2d8] sm:$0xff]
    %v810 = vld [vmem:[#allocation6 + $0x2e0] sm:$0xff]
    %v811 = vld [vmem:[#allocation6 + $0x2e8] sm:$0xff]
    %v812 = vld [vmem:[#allocation6 + $0x2f0] sm:$0xff]
    %v813 = vld [vmem:[#allocation6 + $0x2f8] sm:$0xff]
    %v814 = vld [vmem:[#allocation6 + $0x300] sm:$0xff]
    %v815 = vld [vmem:[#allocation6 + $0x308] sm:$0xff]
    %v816 = vld [vmem:[#allocation6 + $0x310] sm:$0xff]
    %v817 = vld [vmem:[#allocation6 + $0x318] sm:$0xff]
    %v818 = vld [vmem:[#allocation6 + $0x320] sm:$0xff]
    %v819 = vld [vmem:[#allocation6 + $0x328] sm:$0xff]
    %v820 = vld [vmem:[#allocation6 + $0x330] sm:$0xff]
    %v821 = vld [vmem:[#allocation6 + $0x338] sm:$0xff]
    %v822 = vld [vmem:[#allocation6 + $0x340] sm:$0xff]
    %v823 = vld [vmem:[#allocation6 + $0x348] sm:$0xff]
    %v824 = vld [vmem:[#allocation6 + $0x350] sm:$0xff]
    %v825 = vld [vmem:[#allocation6 + $0x358] sm:$0xff]
    %v826 = vld [vmem:[#allocation6 + $0x360] sm:$0xff]
    %v827 = vld [vmem:[#allocation6 + $0x368] sm:$0xff]
    %v828 = vld [vmem:[#allocation6 + $0x370] sm:$0xff]
    %v829 = vld [vmem:[#allocation6 + $0x378] sm:$0xff]
    %v830 = vld [vmem:[#allocation6 + $0x380] sm:$0xff]
    %v831 = vld [vmem:[#allocation6 + $0x388] sm:$0xff]
    %v832 = vld [vmem:[#allocation6 + $0x390] sm:$0xff]
    %v833 = vld [vmem:[#allocation6 + $0x398] sm:$0xff]
    %v834 = vld [vmem:[#allocation6 + $0x3a0] sm:$0xff]
    %v835 = vld [vmem:[#allocation6 + $0x3a8] sm:$0xff]
    %v836 = vld [vmem:[#allocation6 + $0x3b0] sm:$0xff]
    %v837 = vld [vmem:[#allocation6 + $0x3b8] sm:$0xff]
    %v838 = vld [vmem:[#allocation6 + $0x3c0] sm:$0xff]
    %v839 = vld [vmem:[#allocation6 + $0x3c8] sm:$0xff]
    %v840 = vld [vmem:[#allocation6 + $0x3d0] sm:$0xff]
    %v841 = vld [vmem:[#allocation6 + $0x3d8] sm:$0xff]
    %v842 = vld [vmem:[#allocation6 + $0x3e0] sm:$0xff]
    %v843 = vld [vmem:[#allocation6 + $0x3e8] sm:$0xff]
    %v844 = vld [vmem:[#allocation6 + $0x3f0] sm:$0xff]
    %v845 = vld [vmem:[#allocation6 + $0x3f8] sm:$0xff]
    %846 = vmatprep.subr.mxu0 %v839
    %847 = vmatpush1.msra.mxu0 %v838
    %848 = vmatprep.subr.mxu0 %v831
    %849 = vmatpush1.msra.mxu0 %v830
    %850 = vmatprep.subr.mxu0 %v823
    %851 = vmatpush1.msra.mxu0 %v822
    %852 = vmatprep.subr.mxu0 %v815
    %853 = vmatpush1.msra.mxu0 %v814
    %854 = vmatprep.subr.mxu0 %v807
    %855 = vmatpush1.msra.mxu0 %v806
    %856 = vmatprep.subr.mxu0 %v799
    %857 = vmatpush1.msra.mxu0 %v798
    %858 = vmatprep.subr.mxu0 %v791
    %859 = vmatpush1.msra.mxu0 %v790
    %860 = vmatprep.subr.mxu0 %v783
    %861 = vmatpush1.msra.mxu0 %v782
    %862 = vmatprep.subr.mxu0 %v775
    %863 = vmatpush1.msra.mxu0 %v774
    %864 = vmatprep.subr.mxu0 %v767
    %865 = vmatpush1.msra.mxu0 %v766
    %866 = vmatprep.subr.mxu0 %v759
    %867 = vmatpush1.msra.mxu0 %v758
    %868 = vmatprep.subr.mxu0 %v751
    %869 = vmatpush1.msra.mxu0 %v750
    %870 = vmatprep.subr.mxu0 %v743
    %871 = vmatpush1.msra.mxu0 %v742
    %872 = vmatprep.subr.mxu0 %v735
    %873 = vmatpush1.msra.mxu0 %v734
    %874 = vmatprep.subr.mxu0 %v727
    %875 = vmatpush1.msra.mxu0 %v726
    %876 = vmatprep.subr.mxu0 %v719
    %877 = vmatpush1.msra.mxu0 %v718
    %878 = vmatprep.subr.mxu0 0.0
    %879 = vmatpush2.msra.mxu0 0.0
    %880 = vmatprep.subr.mxu0 0.0
    %881 = vmatpush2.msra.mxu0 0.0
    %882 = vmatprep.subr.mxu0 0.0
    %883 = vmatpush2.msra.mxu0 0.0
    %884 = vmatprep.subr.mxu0 0.0
    %885 = vmatpush2.msra.mxu0 0.0
    %886 = vmatprep.subr.mxu0 0.0
    %887 = vmatpush2.msra.mxu0 0.0
    %888 = vmatprep.subr.mxu0 0.0
    %889 = vmatpush2.msra.mxu0 0.0
    %890 = vmatprep.subr.mxu0 0.0
    %891 = vmatpush2.msra.mxu0 0.0
    %892 = vmatprep.subr.mxu0 0.0
    %893 = vmatpush2.msra.mxu0 0.0
    %894 = vmatprep.subr.mxu0 0.0
    %895 = vmatpush2.msra.mxu0 0.0
    %896 = vmatprep.subr.mxu0 0.0
    %897 = vmatpush2.msra.mxu0 0.0
    %898 = vmatprep.subr.mxu0 0.0
    %899 = vmatpush2.msra.mxu0 0.0
    %900 = vmatprep.subr.mxu0 0.0
    %901 = vmatpush2.msra.mxu0 0.0
    %902 = vmatprep.subr.mxu0 0.0
    %903 = vmatpush2.msra.mxu0 0.0
    %904 = vmatprep.subr.mxu0 0.0
    %905 = vmatpush2.msra.mxu0 0.0
    %906 = vmatprep.subr.mxu0 0.0
    %907 = vmatpush2.msra.mxu0 0.0
    %908 = vmatprep.subr.mxu0 0.0
    %909 = vmatpush2.msra.mxu0 0.0
    %910 = vmatprep.mubr.f32.mxu0 0.0
    %911 = vmatmul.mubr.f32.gmra.mxu0 %v715
    %v912 = vpop.f32.mrf.mxu0
    %v913 = vadd.f32 0.0, %v912
    %v914 = vpop.f32.mrf.mxu0
    %v915 = vadd.f32 0.0, %v914
    %916 = vdwg.mxu0
    %917 = vmatprep.subr.mxu0 %v841
    %918 = vmatpush1.msra.mxu0 %v840
    %919 = vmatprep.subr.mxu0 %v833
    %920 = vmatpush1.msra.mxu0 %v832
    %921 = vmatprep.subr.mxu0 %v825
    %922 = vmatpush1.msra.mxu0 %v824
    %923 = vmatprep.subr.mxu0 %v817
    %924 = vmatpush1.msra.mxu0 %v816
    %925 = vmatprep.subr.mxu0 %v809
    %926 = vmatpush1.msra.mxu0 %v808
    %927 = vmatprep.subr.mxu0 %v801
    %928 = vmatpush1.msra.mxu0 %v800
    %929 = vmatprep.subr.mxu0 %v793
    %930 = vmatpush1.msra.mxu0 %v792
    %931 = vmatprep.subr.mxu0 %v785
    %932 = vmatpush1.msra.mxu0 %v784
    %933 = vmatprep.subr.mxu0 %v777
    %934 = vmatpush1.msra.mxu0 %v776
    %935 = vmatprep.subr.mxu0 %v769
    %936 = vmatpush1.msra.mxu0 %v768
    %937 = vmatprep.subr.mxu0 %v761
    %938 = vmatpush1.msra.mxu0 %v760
    %939 = vmatprep.subr.mxu0 %v753
    %940 = vmatpush1.msra.mxu0 %v752
    %941 = vmatprep.subr.mxu0 %v745
    %942 = vmatpush1.msra.mxu0 %v744
    %943 = vmatprep.subr.mxu0 %v737
    %944 = vmatpush1.msra.mxu0 %v736
    %945 = vmatprep.subr.mxu0 %v729
    %946 = vmatpush1.msra.mxu0 %v728
    %947 = vmatprep.subr.mxu0 %v721
    %948 = vmatpush1.msra.mxu0 %v720
    %949 = vmatprep.subr.mxu0 0.0
    %950 = vmatpush2.msra.mxu0 0.0
    %951 = vmatprep.subr.mxu0 0.0
    %952 = vmatpush2.msra.mxu0 0.0
    %953 = vmatprep.subr.mxu0 0.0
    %954 = vmatpush2.msra.mxu0 0.0
    %955 = vmatprep.subr.mxu0 0.0
    %956 = vmatpush2.msra.mxu0 0.0
    %957 = vmatprep.subr.mxu0 0.0
    %958 = vmatpush2.msra.mxu0 0.0
    %959 = vmatprep.subr.mxu0 0.0
    %960 = vmatpush2.msra.mxu0 0.0
    %961 = vmatprep.subr.mxu0 0.0
    %962 = vmatpush2.msra.mxu0 0.0
    %963 = vmatprep.subr.mxu0 0.0
    %964 = vmatpush2.msra.mxu0 0.0
    %965 = vmatprep.subr.mxu0 0.0
    %966 = vmatpush2.msra.mxu0 0.0
    %967 = vmatprep.subr.mxu0 0.0
    %968 = vmatpush2.msra.mxu0 0.0
    %969 = vmatprep.subr.mxu0 0.0
    %970 = vmatpush2.msra.mxu0 0.0
    %971 = vmatprep.subr.mxu0 0.0
    %972 = vmatpush2.msra.mxu0 0.0
    %973 = vmatprep.subr.mxu0 0.0
    %974 = vmatpush2.msra.mxu0 0.0
    %975 = vmatprep.subr.mxu0 0.0
    %976 = vmatpush2.msra.mxu0 0.0
    %977 = vmatprep.subr.mxu0 0.0
    %978 = vmatpush2.msra.mxu0 0.0
    %979 = vmatprep.subr.mxu0 0.0
    %980 = vmatpush2.msra.mxu0 0.0
    %981 = vmatprep.mubr.f32.mxu0 0.0
    %982 = vmatmul.mubr.f32.gmra.mxu0 %v715
    %v983 = vpop.f32.mrf.mxu0
    %v984 = vadd.f32 0.0, %v983
    %v985 = vpop.f32.mrf.mxu0
    %v986 = vadd.f32 0.0, %v985
    %987 = vdwg.mxu0
    %988 = vmatprep.subr.mxu0 %v843
    %989 = vmatpush1.msra.mxu0 %v842
    %990 = vmatprep.subr.mxu0 %v835
    %991 = vmatpush1.msra.mxu0 %v834
    %992 = vmatprep.subr.mxu0 %v827
    %993 = vmatpush1.msra.mxu0 %v826
    %994 = vmatprep.subr.mxu0 %v819
    %995 = vmatpush1.msra.mxu0 %v818
    %996 = vmatprep.subr.mxu0 %v811
    %997 = vmatpush1.msra.mxu0 %v810
    %998 = vmatprep.subr.mxu0 %v803
    %999 = vmatpush1.msra.mxu0 %v802
    %1000 = vmatprep.subr.mxu0 %v795
    %1001 = vmatpush1.msra.mxu0 %v794
    %1002 = vmatprep.subr.mxu0 %v787
    %1003 = vmatpush1.msra.mxu0 %v786
    %1004 = vmatprep.subr.mxu0 %v779
    %1005 = vmatpush1.msra.mxu0 %v778
    %1006 = vmatprep.subr.mxu0 %v771
    %1007 = vmatpush1.msra.mxu0 %v770
    %1008 = vmatprep.subr.mxu0 %v763
    %1009 = vmatpush1.msra.mxu0 %v762
    %1010 = vmatprep.subr.mxu0 %v755
    %1011 = vmatpush1.msra.mxu0 %v754
    %1012 = vmatprep.subr.mxu0 %v747
    %1013 = vmatpush1.msra.mxu0 %v746
    %1014 = vmatprep.subr.mxu0 %v739
    %1015 = vmatpush1.msra.mxu0 %v738
    %1016 = vmatprep.subr.mxu0 %v731
    %1017 = vmatpush1.msra.mxu0 %v730
    %1018 = vmatprep.subr.mxu0 %v723
    %1019 = vmatpush1.msra.mxu0 %v722
    %1020 = vmatprep.subr.mxu0 0.0
    %1021 = vmatpush2.msra.mxu0 0.0
    %1022 = vmatprep.subr.mxu0 0.0
    %1023 = vmatpush2.msra.mxu0 0.0
    %1024 = vmatprep.subr.mxu0 0.0
    %1025 = vmatpush2.msra.mxu0 0.0
    %1026 = vmatprep.subr.mxu0 0.0
    %1027 = vmatpush2.msra.mxu0 0.0
    %1028 = vmatprep.subr.mxu0 0.0
    %1029 = vmatpush2.msra.mxu0 0.0
    %1030 = vmatprep.subr.mxu0 0.0
    %1031 = vmatpush2.msra.mxu0 0.0
    %1032 = vmatprep.subr.mxu0 0.0
    %1033 = vmatpush2.msra.mxu0 0.0
    %1034 = vmatprep.subr.mxu0 0.0
    %1035 = vmatpush2.msra.mxu0 0.0
    %1036 = vmatprep.subr.mxu0 0.0
    %1037 = vmatpush2.msra.mxu0 0.0
    %1038 = vmatprep.subr.mxu0 0.0
    %1039 = vmatpush2.msra.mxu0 0.0
    %1040 = vmatprep.subr.mxu0 0.0
    %1041 = vmatpush2.msra.mxu0 0.0
    %1042 = vmatprep.subr.mxu0 0.0
    %1043 = vmatpush2.msra.mxu0 0.0
    %1044 = vmatprep.subr.mxu0 0.0
    %1045 = vmatpush2.msra.mxu0 0.0
    %1046 = vmatprep.subr.mxu0 0.0
    %1047 = vmatpush2.msra.mxu0 0.0
    %1048 = vmatprep.subr.mxu0 0.0
    %1049 = vmatpush2.msra.mxu0 0.0
    %1050 = vmatprep.subr.mxu0 0.0
    %1051 = vmatpush2.msra.mxu0 0.0
    %1052 = vmatprep.mubr.f32.mxu0 0.0
    %1053 = vmatmul.mubr.f32.gmra.mxu0 %v715
    %v1054 = vpop.f32.mrf.mxu0
    %v1055 = vadd.f32 0.0, %v1054
    %v1056 = vpop.f32.mrf.mxu0
    %v1057 = vadd.f32 0.0, %v1056
    %1058 = vdwg.mxu0
    %1059 = vmatprep.subr.mxu0 %v845
    %1060 = vmatpush1.msra.mxu0 %v844
    %1061 = vmatprep.subr.mxu0 %v837
    %1062 = vmatpush1.msra.mxu0 %v836
    %1063 = vmatprep.subr.mxu0 %v829
    %1064 = vmatpush1.msra.mxu0 %v828
    %1065 = vmatprep.subr.mxu0 %v821
    %1066 = vmatpush1.msra.mxu0 %v820
    %1067 = vmatprep.subr.mxu0 %v813
    %1068 = vmatpush1.msra.mxu0 %v812
    %1069 = vmatprep.subr.mxu0 %v805
    %1070 = vmatpush1.msra.mxu0 %v804
    %1071 = vmatprep.subr.mxu0 %v797
    %1072 = vmatpush1.msra.mxu0 %v796
    %1073 = vmatprep.subr.mxu0 %v789
    %1074 = vmatpush1.msra.mxu0 %v788
    %1075 = vmatprep.subr.mxu0 %v781
    %1076 = vmatpush1.msra.mxu0 %v780
    %1077 = vmatprep.subr.mxu0 %v773
    %1078 = vmatpush1.msra.mxu0 %v772
    %1079 = vmatprep.subr.mxu0 %v765
    %1080 = vmatpush1.msra.mxu0 %v764
    %1081 = vmatprep.subr.mxu0 %v757
    %1082 = vmatpush1.msra.mxu0 %v756
    %1083 = vmatprep.subr.mxu0 %v749
    %1084 = vmatpush1.msra.mxu0 %v748
    %1085 = vmatprep.subr.mxu0 %v741
    %1086 = vmatpush1.msra.mxu0 %v740
    %1087 = vmatprep.subr.mxu0 %v733
    %1088 = vmatpush1.msra.mxu0 %v732
    %1089 = vmatprep.subr.mxu0 %v725
    %1090 = vmatpush1.msra.mxu0 %v724
    %1091 = vmatprep.subr.mxu0 0.0
    %1092 = vmatpush2.msra.mxu0 0.0
    %1093 = vmatprep.subr.mxu0 0.0
    %1094 = vmatpush2.msra.mxu0 0.0
    %1095 = vmatprep.subr.mxu0 0.0
    %1096 = vmatpush2.msra.mxu0 0.0
    %1097 = vmatprep.subr.mxu0 0.0
    %1098 = vmatpush2.msra.mxu0 0.0
    %1099 = vmatprep.subr.mxu0 0.0
    %1100 = vmatpush2.msra.mxu0 0.0
    %1101 = vmatprep.subr.mxu0 0.0
    %1102 = vmatpush2.msra.mxu0 0.0
    %1103 = vmatprep.subr.mxu0 0.0
    %1104 = vmatpush2.msra.mxu0 0.0
    %1105 = vmatprep.subr.mxu0 0.0
    %1106 = vmatpush2.msra.mxu0 0.0
    %1107 = vmatprep.subr.mxu0 0.0
    %1108 = vmatpush2.msra.mxu0 0.0
    %1109 = vmatprep.subr.mxu0 0.0
    %1110 = vmatpush2.msra.mxu0 0.0
    %1111 = vmatprep.subr.mxu0 0.0
    %1112 = vmatpush2.msra.mxu0 0.0
    %1113 = vmatprep.subr.mxu0 0.0
    %1114 = vmatpush2.msra.mxu0 0.0
    %1115 = vmatprep.subr.mxu0 0.0
    %1116 = vmatpush2.msra.mxu0 0.0
    %1117 = vmatprep.subr.mxu0 0.0
    %1118 = vmatpush2.msra.mxu0 0.0
    %1119 = vmatprep.subr.mxu0 0.0
    %1120 = vmatpush2.msra.mxu0 0.0
    %1121 = vmatprep.subr.mxu0 0.0
    %1122 = vmatpush2.msra.mxu0 0.0
    %1123 = vmatprep.mubr.f32.mxu0 0.0
    %1124 = vmatmul.mubr.f32.gmra.mxu0 %v715
    %v1125 = vpop.f32.mrf.mxu0
    %v1126 = vadd.f32 0.0, %v1125
    %v1127 = vpop.f32.mrf.mxu0
    %v1128 = vadd.f32 0.0, %v1127
    %1129 = vdwg.mxu0
    %v1131 = vlaneseq
    %v1132 = vshrl.u32 %v1131, 7
    %v1133 = vsub.s32 0, %v1132
    %v1134 = vrot.slane %v124, %v1133
    %v1135 = vlaneseq
    %v1136 = vshrl.u32 %v1135, 7
    %v1137 = vsub.s32 1, %v1136
    %v1138 = vrot.slane %v124, %v1137
    %v1139 = vlaneseq
    %v1140 = vshrl.u32 %v1139, 7
    %v1141 = vsub.s32 2, %v1140
    %v1142 = vrot.slane %v124, %v1141
    %v1143 = vlaneseq
    %v1144 = vshrl.u32 %v1143, 7
    %v1145 = vsub.s32 3, %v1144
    %v1146 = vrot.slane %v124, %v1145
    %v1147 = vlaneseq
    %v1148 = vshrl.u32 %v1147, 7
    %v1149 = vsub.s32 4, %v1148
    %v1150 = vrot.slane %v124, %v1149
    %v1151 = vlaneseq
    %v1152 = vshrl.u32 %v1151, 7
    %v1153 = vsub.s32 5, %v1152
    %v1154 = vrot.slane %v124, %v1153
    %v1155 = vlaneseq
    %v1156 = vshrl.u32 %v1155, 7
    %v1157 = vsub.s32 6, %v1156
    %v1158 = vrot.slane %v124, %v1157
    %v1159 = vlaneseq
    %v1160 = vshrl.u32 %v1159, 7
    %v1161 = vsub.s32 7, %v1160
    %v1162 = vrot.slane %v124, %v1161
    %v1171 = vmul.f32 %v913, %v1134
    %v1172 = vmul.f32 %v915, %v1138
    %v1173 = vmul.f32 %v984, %v1142
    %v1174 = vmul.f32 %v986, %v1146
    %v1175 = vmul.f32 %v1055, %v1150
    %v1176 = vmul.f32 %v1057, %v1154
    %v1177 = vmul.f32 %v1126, %v1158
    %v1178 = vmul.f32 %v1128, %v1162
    %v1180 = vlaneseq
    %v1181 = vshrl.u32 %v1180, 7
    %v1182 = vsub.s32 0, %v1181
    %v1183 = vrot.slane %v128, %v1182
    %v1184 = vlaneseq
    %v1185 = vshrl.u32 %v1184, 7
    %v1186 = vsub.s32 1, %v1185
    %v1187 = vrot.slane %v128, %v1186
    %v1188 = vlaneseq
    %v1189 = vshrl.u32 %v1188, 7
    %v1190 = vsub.s32 2, %v1189
    %v1191 = vrot.slane %v128, %v1190
    %v1192 = vlaneseq
    %v1193 = vshrl.u32 %v1192, 7
    %v1194 = vsub.s32 3, %v1193
    %v1195 = vrot.slane %v128, %v1194
    %v1196 = vlaneseq
    %v1197 = vshrl.u32 %v1196, 7
    %v1198 = vsub.s32 4, %v1197
    %v1199 = vrot.slane %v128, %v1198
    %v1200 = vlaneseq
    %v1201 = vshrl.u32 %v1200, 7
    %v1202 = vsub.s32 5, %v1201
    %v1203 = vrot.slane %v128, %v1202
    %v1204 = vlaneseq
    %v1205 = vshrl.u32 %v1204, 7
    %v1206 = vsub.s32 6, %v1205
    %v1207 = vrot.slane %v128, %v1206
    %v1208 = vlaneseq
    %v1209 = vshrl.u32 %v1208, 7
    %v1210 = vsub.s32 7, %v1209
    %v1211 = vrot.slane %v128, %v1210
    %v1220 = vadd.f32 %v1171, %v1183
    %v1221 = vadd.f32 %v1172, %v1187
    %v1222 = vadd.f32 %v1173, %v1191
    %v1223 = vadd.f32 %v1174, %v1195
    %v1224 = vadd.f32 %v1175, %v1199
    %v1225 = vadd.f32 %v1176, %v1203
    %v1226 = vadd.f32 %v1177, %v1207
    %v1227 = vadd.f32 %v1178, %v1211
    %v1228 = vmax.f32 %v1220, 0.0
    %v1229 = vmax.f32 %v1221, 0.0
    %v1230 = vmax.f32 %v1222, 0.0
    %v1231 = vmax.f32 %v1223, 0.0
    %v1232 = vmax.f32 %v1224, 0.0
    %v1233 = vmax.f32 %v1225, 0.0
    %v1234 = vmax.f32 %v1226, 0.0
    %v1235 = vmax.f32 %v1227, 0.0
    %v1236 = vmin.f32 %v1228, 1.0
    %v1237 = vmin.f32 %v1229, 1.0
    %v1238 = vmin.f32 %v1230, 1.0
    %v1239 = vmin.f32 %v1231, 1.0
    %v1240 = vmin.f32 %v1232, 1.0
    %v1241 = vmin.f32 %v1233, 1.0
    %v1242 = vmin.f32 %v1234, 1.0
    %v1243 = vmin.f32 %v1235, 1.0
    %v1244 = vmul.f32 %v1236, %v1238
    %v1245 = vmul.f32 %v1237, %v1239
    %v1246 = vmul.f32 %v1244, %v1240
    %v1247 = vmul.f32 %v1245, %v1241
    %v1248 = vmul.f32 %v1246, %v1242
    %v1249 = vmul.f32 %v1247, %v1243
    %s1250 = scalar_lea.vmem [#allocation9], 256
    %v1251 = vld [vmem:[%s1250] sm:$0xff]
    %v1252 = vld [vmem:[%s1250 + $0x8] sm:$0xff]
    %v1253 = vld [vmem:[%s1250 + $0x10] sm:$0xff]
    %v1254 = vld [vmem:[%s1250 + $0x18] sm:$0xff]
    %v1255 = vld [vmem:[%s1250 + $0x20] sm:$0xff]
    %v1256 = vld [vmem:[%s1250 + $0x28] sm:$0xff]
    %v1257 = vld [vmem:[%s1250 + $0x30] sm:$0xff]
    %v1258 = vld [vmem:[%s1250 + $0x38] sm:$0xff]
    %v1259 = vld [vmem:[%s1250 + $0x40] sm:$0xff]
    %v1260 = vld [vmem:[%s1250 + $0x48] sm:$0xff]
    %v1261 = vld [vmem:[%s1250 + $0x50] sm:$0xff]
    %v1262 = vld [vmem:[%s1250 + $0x58] sm:$0xff]
    %v1263 = vld [vmem:[%s1250 + $0x60] sm:$0xff]
    %v1264 = vld [vmem:[%s1250 + $0x68] sm:$0xff]
    %v1265 = vld [vmem:[%s1250 + $0x70] sm:$0xff]
    %v1266 = vld [vmem:[%s1250 + $0x78] sm:$0xff]
    %v1267 = vld [vmem:[%s1250 + $0x80] sm:$0xff]
    %v1268 = vld [vmem:[%s1250 + $0x88] sm:$0xff]
    %v1269 = vld [vmem:[%s1250 + $0x90] sm:$0xff]
    %v1270 = vld [vmem:[%s1250 + $0x98] sm:$0xff]
    %v1271 = vld [vmem:[%s1250 + $0xa0] sm:$0xff]
    %v1272 = vld [vmem:[%s1250 + $0xa8] sm:$0xff]
    %v1273 = vld [vmem:[%s1250 + $0xb0] sm:$0xff]
    %v1274 = vld [vmem:[%s1250 + $0xb8] sm:$0xff]
    %v1275 = vld [vmem:[%s1250 + $0xc0] sm:$0xff]
    %v1276 = vld [vmem:[%s1250 + $0xc8] sm:$0xff]
    %v1277 = vld [vmem:[%s1250 + $0xd0] sm:$0xff]
    %v1278 = vld [vmem:[%s1250 + $0xd8] sm:$0xff]
    %v1279 = vld [vmem:[%s1250 + $0xe0] sm:$0xff]
    %v1280 = vld [vmem:[%s1250 + $0xe8] sm:$0xff]
    %v1281 = vld [vmem:[%s1250 + $0xf0] sm:$0xff]
    %v1282 = vld [vmem:[%s1250 + $0xf8] sm:$0xff]
    %1283 = vmatprep.subr.mxu0 0.0
    %1284 = vmatpush1.msra.mxu0 %v1266
    %1285 = vmatprep.subr.mxu0 0.0
    %1286 = vmatpush1.msra.mxu0 %v1265
    %1287 = vmatprep.subr.mxu0 0.0
    %1288 = vmatpush1.msra.mxu0 %v1264
    %1289 = vmatprep.subr.mxu0 0.0
    %1290 = vmatpush1.msra.mxu0 %v1263
    %1291 = vmatprep.subr.mxu0 0.0
    %1292 = vmatpush1.msra.mxu0 %v1262
    %1293 = vmatprep.subr.mxu0 0.0
    %1294 = vmatpush1.msra.mxu0 %v1261
    %1295 = vmatprep.subr.mxu0 0.0
    %1296 = vmatpush1.msra.mxu0 %v1260
    %1297 = vmatprep.subr.mxu0 0.0
    %1298 = vmatpush1.msra.mxu0 %v1259
    %1299 = vmatprep.subr.mxu0 0.0
    %1300 = vmatpush1.msra.mxu0 %v1258
    %1301 = vmatprep.subr.mxu0 0.0
    %1302 = vmatpush1.msra.mxu0 %v1257
    %1303 = vmatprep.subr.mxu0 0.0
    %1304 = vmatpush1.msra.mxu0 %v1256
    %1305 = vmatprep.subr.mxu0 0.0
    %1306 = vmatpush1.msra.mxu0 %v1255
    %1307 = vmatprep.subr.mxu0 0.0
    %1308 = vmatpush1.msra.mxu0 %v1254
    %1309 = vmatprep.subr.mxu0 0.0
    %1310 = vmatpush1.msra.mxu0 %v1253
    %1311 = vmatprep.subr.mxu0 0.0
    %1312 = vmatpush1.msra.mxu0 %v1252
    %1313 = vmatprep.subr.mxu0 0.0
    %1314 = vmatpush1.msra.mxu0 %v1251
    %1315 = vmatprep.subr.mxu0 0.0
    %1316 = vmatpush2.msra.mxu0 %v1282
    %1317 = vmatprep.subr.mxu0 0.0
    %1318 = vmatpush2.msra.mxu0 %v1281
    %1319 = vmatprep.subr.mxu0 0.0
    %1320 = vmatpush2.msra.mxu0 %v1280
    %1321 = vmatprep.subr.mxu0 0.0
    %1322 = vmatpush2.msra.mxu0 %v1279
    %1323 = vmatprep.subr.mxu0 0.0
    %1324 = vmatpush2.msra.mxu0 %v1278
    %1325 = vmatprep.subr.mxu0 0.0
    %1326 = vmatpush2.msra.mxu0 %v1277
    %1327 = vmatprep.subr.mxu0 0.0
    %1328 = vmatpush2.msra.mxu0 %v1276
    %1329 = vmatprep.subr.mxu0 0.0
    %1330 = vmatpush2.msra.mxu0 %v1275
    %1331 = vmatprep.subr.mxu0 0.0
    %1332 = vmatpush2.msra.mxu0 %v1274
    %1333 = vmatprep.subr.mxu0 0.0
    %1334 = vmatpush2.msra.mxu0 %v1273
    %1335 = vmatprep.subr.mxu0 0.0
    %1336 = vmatpush2.msra.mxu0 %v1272
    %1337 = vmatprep.subr.mxu0 0.0
    %1338 = vmatpush2.msra.mxu0 %v1271
    %1339 = vmatprep.subr.mxu0 0.0
    %1340 = vmatpush2.msra.mxu0 %v1270
    %1341 = vmatprep.subr.mxu0 0.0
    %1342 = vmatpush2.msra.mxu0 %v1269
    %1343 = vmatprep.subr.mxu0 0.0
    %1344 = vmatpush2.msra.mxu0 %v1268
    %1345 = vmatprep.subr.mxu0 0.0
    %1346 = vmatpush2.msra.mxu0 %v1267
    %1347 = vmatprep.mubr.f32.mxu0 %v1249
    %1348 = vmatmul.mubr.f32.gmra.mxu0 %v1248
    %v1349 = vpop.f32.mrf.mxu0
    %v1350 = vadd.f32 0.0, %v1349
    %v1351 = vpop.f32.mrf.mxu0
    %1352 = vdwg.mxu0
    %v1353 = vadd.f32 %v715, %v1350
    %v1354 = vld [vmem:[#allocation10] sm:$0xff]
    %v1355 = vld [vmem:[#allocation10 + $0x8] sm:$0xff]
    %v1356 = vld [vmem:[#allocation10 + $0x10] sm:$0xff]
    %v1357 = vld [vmem:[#allocation10 + $0x18] sm:$0xff]
    %v1358 = vld [vmem:[#allocation10 + $0x20] sm:$0xff]
    %v1359 = vld [vmem:[#allocation10 + $0x28] sm:$0xff]
    %v1360 = vld [vmem:[#allocation10 + $0x30] sm:$0xff]
    %v1361 = vld [vmem:[#allocation10 + $0x38] sm:$0xff]
    %v1362 = vld [vmem:[#allocation10 + $0x40] sm:$0xff]
    %v1363 = vld [vmem:[#allocation10 + $0x48] sm:$0xff]
    %v1364 = vld [vmem:[#allocation10 + $0x50] sm:$0xff]
    %v1365 = vld [vmem:[#allocation10 + $0x58] sm:$0xff]
    %v1366 = vld [vmem:[#allocation10 + $0x60] sm:$0xff]
    %v1367 = vld [vmem:[#allocation10 + $0x68] sm:$0xff]
    %v1368 = vld [vmem:[#allocation10 + $0x70] sm:$0xff]
    %v1369 = vld [vmem:[#allocation10 + $0x78] sm:$0xff]
    %1370 = vmatprep.subr.mxu0 0.0
    %1371 = vmatpush1.msra.mxu0 %v1369
    %1372 = vmatprep.subr.mxu0 0.0
    %1373 = vmatpush1.msra.mxu0 %v1368
    %1374 = vmatprep.subr.mxu0 0.0
    %1375 = vmatpush1.msra.mxu0 %v1367
    %1376 = vmatprep.subr.mxu0 0.0
    %1377 = vmatpush1.msra.mxu0 %v1366
    %1378 = vmatprep.subr.mxu0 0.0
    %1379 = vmatpush1.msra.mxu0 %v1365
    %1380 = vmatprep.subr.mxu0 0.0
    %1381 = vmatpush1.msra.mxu0 %v1364
    %1382 = vmatprep.subr.mxu0 0.0
    %1383 = vmatpush1.msra.mxu0 %v1363
    %1384 = vmatprep.subr.mxu0 0.0
    %1385 = vmatpush1.msra.mxu0 %v1362
    %1386 = vmatprep.subr.mxu0 0.0
    %1387 = vmatpush1.msra.mxu0 %v1361
    %1388 = vmatprep.subr.mxu0 0.0
    %1389 = vmatpush1.msra.mxu0 %v1360
    %1390 = vmatprep.subr.mxu0 0.0
    %1391 = vmatpush1.msra.mxu0 %v1359
    %1392 = vmatprep.subr.mxu0 0.0
    %1393 = vmatpush1.msra.mxu0 %v1358
    %1394 = vmatprep.subr.mxu0 0.0
    %1395 = vmatpush1.msra.mxu0 %v1357
    %1396 = vmatprep.subr.mxu0 0.0
    %1397 = vmatpush1.msra.mxu0 %v1356
    %1398 = vmatprep.subr.mxu0 0.0
    %1399 = vmatpush1.msra.mxu0 %v1355
    %1400 = vmatprep.subr.mxu0 0.0
    %1401 = vmatpush1.msra.mxu0 %v1354
    %1402 = vmatprep.subr.mxu0 0.0
    %1403 = vmatpush2.msra.mxu0 0.0
    %1404 = vmatprep.subr.mxu0 0.0
    %1405 = vmatpush2.msra.mxu0 0.0
    %1406 = vmatprep.subr.mxu0 0.0
    %1407 = vmatpush2.msra.mxu0 0.0
    %1408 = vmatprep.subr.mxu0 0.0
    %1409 = vmatpush2.msra.mxu0 0.0
    %1410 = vmatprep.subr.mxu0 0.0
    %1411 = vmatpush2.msra.mxu0 0.0
    %1412 = vmatprep.subr.mxu0 0.0
    %1413 = vmatpush2.msra.mxu0 0.0
    %1414 = vmatprep.subr.mxu0 0.0
    %1415 = vmatpush2.msra.mxu0 0.0
    %1416 = vmatprep.subr.mxu0 0.0
    %1417 = vmatpush2.msra.mxu0 0.0
    %1418 = vmatprep.subr.mxu0 0.0
    %1419 = vmatpush2.msra.mxu0 0.0
    %1420 = vmatprep.subr.mxu0 0.0
    %1421 = vmatpush2.msra.mxu0 0.0
    %1422 = vmatprep.subr.mxu0 0.0
    %1423 = vmatpush2.msra.mxu0 0.0
    %1424 = vmatprep.subr.mxu0 0.0
    %1425 = vmatpush2.msra.mxu0 0.0
    %1426 = vmatprep.subr.mxu0 0.0
    %1427 = vmatpush2.msra.mxu0 0.0
    %1428 = vmatprep.subr.mxu0 0.0
    %1429 = vmatpush2.msra.mxu0 0.0
    %1430 = vmatprep.subr.mxu0 0.0
    %1431 = vmatpush2.msra.mxu0 0.0
    %1432 = vmatprep.subr.mxu0 0.0
    %1433 = vmatpush2.msra.mxu0 0.0
    %1434 = vmatprep.mubr.f32.mxu0 0.0
    %1435 = vmatmul.mubr.f32.gmra.mxu0 %v1353
    %v1436 = vpop.f32.mrf.mxu0
    %v1437 = vadd.f32 0.0, %v1436
    %v1438 = vpop.f32.mrf.mxu0
    %1439 = vdwg.mxu0
    %1440 = vst [vmem:[%s7] sm:$0xff] %v1437
    // Predicated region
    $region58: #{clf_differential_tree_forward.1} parent=1 // pred_check
      _
    $region59: #{clf_differential_tree_forward.1} parent=1 // pred_check_branch
      %1442 = sbr.rel (0) target = $region61
    $region60: #{clf_differential_tree_forward.1} parent=1 // pred_region
      _
    $region61: #{clf_differential_tree_forward.1} parent=1 // pred_fallthru
      _
    // Predicated region
    $region62: #{clf_differential_tree_forward.1} parent=1 // pred_check
      _
    $region63: #{clf_differential_tree_forward.1} parent=1 // pred_check_branch
      %1444 = sbr.rel (0) target = $region65
    $region64: #{clf_differential_tree_forward.1} parent=1 // pred_region
      _
    $region65: #{clf_differential_tree_forward.1} parent=1 // pred_fallthru
      _
    %1445 = vsyncpa [#allocation3], 1
    %1446 = vsyncpa [#allocation5], 1
    %1447 = vsyncpa [#allocation8], 1
    %1448 = vsyncpa [#allocation11], 1

</llo_original>
